<compile_context>
chip_gen: v7x
topology: tpu7x:2x2x1
jax: 0.10.0
libtpu: 0.0.40
codegen_flags: <defaults>
</compile_context>

<pallas_src>
import functools
import math

import jax
import jax.numpy as jnp
from jax.experimental import pallas as pl
from jax.experimental.pallas import tpu as pltpu


def highway_kernel(x_ref, w_ref, b_ref, o_ref, *, num_layers, num_units,
                   interleave):
    """x_ref: [TM, Up] row tile; w_ref: [L, Up, 2*Up] bf16; b_ref: [L, 2*Up] f32."""
    U = num_units  # padded (lane-dense) unit count

    def layer_elem(out, pre):
        h = jnp.maximum(pre[:, :U], 0.0)                 # relu branch (VPU)
        t = 0.5 * (1.0 + jnp.tanh(0.5 * pre[:, U:]))     # sigmoid via EUP tanh
        return out + t * (h - out)                       # == h*t + out*(1-t)

    # Static unroll: num_layers is small (4).  For large L switch to
    # lax.fori_loop(..., unroll=True) to bound live ranges / code size.
    if interleave:
        half = x_ref.shape[0] // 2
        out_a = x_ref[:half, :].astype(jnp.float32)
        out_b = x_ref[half:, :].astype(jnp.float32)
        for l in range(num_layers):
            w = w_ref[l]
            b = b_ref[l]
            pre_a = jnp.dot(out_a.astype(jnp.bfloat16), w,
                            preferred_element_type=jnp.float32) + b
            pre_b = jnp.dot(out_b.astype(jnp.bfloat16), w,
                            preferred_element_type=jnp.float32) + b
            out_a = layer_elem(out_a, pre_a)
            out_b = layer_elem(out_b, pre_b)
        o_ref[:half, :] = out_a.astype(o_ref.dtype)
        o_ref[half:, :] = out_b.astype(o_ref.dtype)
    else:
        out = x_ref[...].astype(jnp.float32)
        for l in range(num_layers):
            pre = jnp.dot(out.astype(jnp.bfloat16), w_ref[l],
                          preferred_element_type=jnp.float32) + b_ref[l]
            out = layer_elem(out, pre)
        o_ref[...] = out.astype(o_ref.dtype)


def _default_row_tile(rows):
    """Largest multiple-of-8 tile that still gives >=2 grid steps, preferring
    an even step count (v7x TensorCore balance) when it costs <= one halving."""
    if rows <= 16:
        return 8
    best = None
    best_even = None
    for tile in (1024, 512, 256, 128, 64, 32, 16, 8):
        steps = -(-rows // tile)
        if steps < 2:
            continue
        if best is None:
            best = tile
        if best_even is None and steps % 2 == 0:
            best_even = tile
    if best is None:
        return 8
    if best_even is not None and best_even * 2 >= best:
        return best_even
    return best


def _vmem_cap_bytes():
    """Physical VMEM per TensorCore minus 25% headroom (Mosaic scratch, spills)."""
    phys = 64 * 1024 * 1024  # conservative default = v7x per-TC VMEM
    try:
        info = pltpu.get_tpu_info()
        phys = int(getattr(info, "vmem_capacity_bytes", phys)) or phys
    except Exception:
        pass
    return (phys * 3) // 4


def _pack_and_pad_params(lin_w, lin_b, gate_w, gate_b, u_pad):
    """Fuse per-layer H/T weights along the output dim and zero-pad the unit
    dim to u_pad (lane-dense).  Weights -> bf16 MXU operands, biases -> f32."""
    L, U, _ = lin_w.shape
    pad = u_pad - U

    def pw(w):
        return jnp.pad(w, ((0, 0), (0, pad), (0, pad))) if pad else w

    def pb(b):
        return jnp.pad(b, ((0, 0), (0, pad))) if pad else b

    w = jnp.concatenate([pw(lin_w), pw(gate_w)], axis=-1).astype(jnp.bfloat16)
    b = jnp.concatenate([pb(lin_b), pb(gate_b)], axis=-1).astype(jnp.float32)
    return w, b


def _highway_call(x2, w_packed, b_packed, *, row_tile, padded_rows, u_pad, L,
                  out_dtype, interleave, single_buffer_weights, vmem_limit):
    kernel = functools.partial(highway_kernel, num_layers=L, num_units=u_pad,
                               interleave=interleave)
    if single_buffer_weights:
        # Grid-invariant blocks: one VMEM buffer is enough (never re-DMA'd).
        w_spec = pl.BlockSpec((L, u_pad, 2 * u_pad), lambda i: (0, 0, 0),
                              pipeline_mode=pl.Buffered(1))
        b_spec = pl.BlockSpec((L, 2 * u_pad), lambda i: (0, 0),
                              pipeline_mode=pl.Buffered(1))
    else:
        w_spec = pl.BlockSpec((L, u_pad, 2 * u_pad), lambda i: (0, 0, 0))
        b_spec = pl.BlockSpec((L, 2 * u_pad), lambda i: (0, 0))

    return pl.pallas_call(
        kernel,
        out_shape=jax.ShapeDtypeStruct((padded_rows, u_pad), out_dtype),
        grid_spec=pltpu.PrefetchScalarGridSpec(
            num_scalar_prefetch=0,
            grid=(padded_rows // row_tile,),
            in_specs=[
                pl.BlockSpec((row_tile, u_pad), lambda i: (i, 0)),  # x rows
                w_spec,                                             # fused W
                b_spec,                                             # fused b
            ],
            out_specs=pl.BlockSpec((row_tile, u_pad), lambda i: (i, 0)),
        ),
        compiler_params=pltpu.CompilerParams(
            dimension_semantics=("parallel",),
            vmem_limit_bytes=vmem_limit),
    )(x2, w_packed, b_packed)


def highwaynet_forward(x, lin_w, lin_b, gate_w, gate_b, *, row_tile=None,
                       activation_dtype=None):
    """x: [B, S, U]; lin_w/gate_w: [L, U, U] in x @ W layout; lin_b/gate_b: [L, U].
    Returns [B, S, U] in activation_dtype (default: x.dtype)."""
    B, S, U = x.shape
    L = lin_w.shape[0]
    rows = B * S

    # Lane-dense unit padding (multiple of 128).
    u_pad = pl.cdiv(U, 128) * 128
    w_packed, b_packed = _pack_and_pad_params(lin_w, lin_b, gate_w, gate_b, u_pad)

    io_dtype = jnp.dtype(activation_dtype) if activation_dtype is not None \
        else x.dtype
    x2 = x.reshape(rows, U).astype(io_dtype)

    if row_tile is None:
        row_tile = _default_row_tile(rows)
    row_tile = max(8, (int(row_tile) // 8) * 8)

    padded_rows = pl.cdiv(rows, row_tile) * row_tile
    pad_r = padded_rows - rows
    pad_c = u_pad - U
    if pad_r or pad_c:
        x2 = jnp.pad(x2, ((0, pad_r), (0, pad_c)))  # pad rows/features with 0

    interleave = (row_tile >= 16) and (row_tile % 16 == 0)

    # VMEM budget: double-buffered x/out tiles (io dtype), resident packed
    # weights/biases (counted double-buffered as the conservative case), and
    # the live f32 [TM, 2*Up] intermediates (pre/h/t/out) that spill to VMEM.
    itemsize = jnp.dtype(io_dtype).itemsize
    tile_bytes = row_tile * u_pad * itemsize
    w_bytes = L * u_pad * (2 * u_pad) * 2
    b_bytes = L * (2 * u_pad) * 4
    interm = 4 * row_tile * (2 * u_pad) * 4
    footprint = 2 * 2 * tile_bytes + 2 * (w_bytes + b_bytes) + interm
    vmem_limit = int(min(_vmem_cap_bytes(),
                         max(2 * footprint, 32 * 1024 * 1024)))

    call = functools.partial(
        _highway_call, x2, w_packed, b_packed, row_tile=row_tile,
        padded_rows=padded_rows, u_pad=u_pad, L=L, out_dtype=io_dtype,
        interleave=interleave, vmem_limit=vmem_limit)
    try:
        out2 = call(single_buffer_weights=True)
    except Exception:
        # pipeline_mode=pl.Buffered(1) not supported on this jax version:
        # retry with default (double-buffered) grid-invariant weight specs.
        out2 = call(single_buffer_weights=False)

    return out2[:rows, :U].reshape(B, S, U)


def init_params(key, num_units, num_layers):
    """Deterministic synthetic init mirroring the PyTorch module:
    xavier_uniform_ (gain('linear')=1) weights, nn.Linear default bias."""
    U, L = num_units, num_layers
    w_bound = math.sqrt(6.0 / (U + U))   # xavier uniform, gain('linear') = 1
    b_bound = 1.0 / math.sqrt(U)         # default nn.Linear bias init
    k1, k2, k3, k4 = jax.random.split(key, 4)
    # Stored as [L, in, out] so the kernel does x @ W (== x @ W_torch.T).
    lin_w = jax.random.uniform(k1, (L, U, U), jnp.float32, -w_bound, w_bound)
    gate_w = jax.random.uniform(k2, (L, U, U), jnp.float32, -w_bound, w_bound)
    lin_b = jax.random.uniform(k3, (L, U), jnp.float32, -b_bound, b_bound)
    gate_b = jax.random.uniform(k4, (L, U), jnp.float32, -b_bound, b_bound)
    return lin_w, lin_b, gate_w, gate_b


def highwaynet_reference(x, lin_w, lin_b, gate_w, gate_b):
    """Pure-JAX f32 reference of the PyTorch forward."""
    out = x.astype(jnp.float32)
    for l in range(lin_w.shape[0]):
        h = jax.nn.relu(out @ lin_w[l] + lin_b[l])
        t = jax.nn.sigmoid(out @ gate_w[l] + gate_b[l])
        out = h * t + out * (1.0 - t)
    return out.astype(x.dtype)


if __name__ == "__main__":
    B, S, U, L = 2, 8, 32, 4   # batch, seq_len, num_units, num_layers

    key = jax.random.PRNGKey(0)
    kx, kp = jax.random.split(key)
    x = jax.random.normal(kx, (B, S, U), dtype=jnp.float32)
    lin_w, lin_b, gate_w, gate_b = init_params(kp, U, L)
    ref = highwaynet_reference(x, lin_w, lin_b, gate_w, gate_b)

    # Default (f32 activation I/O) path.
    out = highwaynet_forward(x, lin_w, lin_b, gate_w, gate_b)
    out = jax.block_until_ready(out)
    assert out.shape == (B, S, U)
    # bf16 MXU operands with f32 accumulation -> loose tolerance vs f32 ref.
    assert jnp.allclose(out, ref, atol=5e-2, rtol=5e-2), "f32-I/O mismatch"

    # bf16 activation I/O path (halves HBM traffic; math stays f32 in-kernel).
    out_bf16 = highwaynet_forward(x, lin_w, lin_b, gate_w, gate_b,
                                  activation_dtype=jnp.bfloat16)
    out_bf16 = jax.block_until_ready(out_bf16)
    assert out_bf16.dtype == jnp.bfloat16
    assert jnp.allclose(out_bf16.astype(jnp.float32), ref,
                        atol=1e-1, rtol=1e-1), "bf16-I/O mismatch"

    print("KERNEL_OK")
</pallas_src>

<mosaic_0001>
module attributes {stable_mosaic.version = 11 : i64} {
  func.func @highway_kernel(%arg0: i32, %arg1: memref<8x128xf32, #tpu.memory_space<vmem>>, %arg2: memref<4x128x256xbf16, #tpu.memory_space<vmem>>, %arg3: memref<4x256xf32, #tpu.memory_space<vmem>>, %arg4: memref<8x128xf32, #tpu.memory_space<vmem>>) attributes {dimension_semantics = [#tpu.dimension_semantics<parallel>], iteration_bounds = array<i64: 2>, scalar_prefetch = 0 : i64, scratch_operands = 0 : i64, tpu.core_type = #tpu.core_type<tc>, window_params = [{transform_indices = @transform_0, window_bounds = array<i64: 8, 128>}, {pipeline_mode = #tpu.pipeline_mode<synchronous>, transform_indices = @transform_1, window_bounds = array<i64: 4, 128, 256>}, {pipeline_mode = #tpu.pipeline_mode<synchronous>, transform_indices = @transform_2, window_bounds = array<i64: 4, 256>}, {transform_indices = @transform_3, window_bounds = array<i64: 8, 128>}]} {
    %c0 = arith.constant 0 : index
    %c0_0 = arith.constant 0 : index
    %0 = vector.load %arg1[%c0, %c0_0] : memref<8x128xf32, #tpu.memory_space<vmem>>, vector<8x128xf32>
    %1 = arith.truncf %0 : vector<8x128xf32> to vector<8x128xbf16>
    %c0_1 = arith.constant 0 : index
    %c0_2 = arith.constant 0 : index
    %c0_3 = arith.constant 0 : index
    %2 = vector.load %arg2[%c0_1, %c0_2, %c0_3] : memref<4x128x256xbf16, #tpu.memory_space<vmem>>, vector<1x128x256xbf16>
    %3 = vector.shape_cast %2 : vector<1x128x256xbf16> to vector<128x256xbf16>
    %cst = arith.constant dense<0.000000e+00> : vector<8x256xf32>
    %4 = tpu.matmul %1, %3, %cst {dimension_numbers = #tpu.dot_dimension_numbers<[1], [0], [0], [1], [0, 0, 1, 1], [], []>} : vector<8x128xbf16>, vector<128x256xbf16>, vector<8x256xf32> -> vector<8x256xf32>
    %c0_4 = arith.constant 0 : index
    %c0_5 = arith.constant 0 : index
    %5 = vector.load %arg3[%c0_4, %c0_5] : memref<4x256xf32, #tpu.memory_space<vmem>>, vector<1x256xf32>
    %6 = vector.shape_cast %5 : vector<1x256xf32> to vector<256xf32>
    %7 = vector.shape_cast %6 : vector<256xf32> to vector<1x256xf32>
    %8 = vector.broadcast %7 : vector<1x256xf32> to vector<8x256xf32>
    %9 = arith.addf %4, %8 : vector<8x256xf32>
    %10 = vector.extract_strided_slice %9 {offsets = [0, 0], sizes = [8, 128], strides = [1, 1]} : vector<8x256xf32> to vector<8x128xf32>
    %cst_6 = arith.constant 0.000000e+00 : f32
    %11 = vector.broadcast %cst_6 : f32 to vector<8x128xf32>
    %12 = arith.maximumf %10, %11 : vector<8x128xf32>
    %13 = vector.extract_strided_slice %9 {offsets = [0, 128], sizes = [8, 128], strides = [1, 1]} : vector<8x256xf32> to vector<8x128xf32>
    %cst_7 = arith.constant 5.000000e-01 : f32
    %14 = vector.broadcast %cst_7 : f32 to vector<8x128xf32>
    %15 = arith.mulf %14, %13 : vector<8x128xf32>
    %16 = math.tanh %15 : vector<8x128xf32>
    %cst_8 = arith.constant 1.000000e+00 : f32
    %17 = vector.broadcast %cst_8 : f32 to vector<8x128xf32>
    %18 = arith.addf %17, %16 : vector<8x128xf32>
    %cst_9 = arith.constant 5.000000e-01 : f32
    %19 = vector.broadcast %cst_9 : f32 to vector<8x128xf32>
    %20 = arith.mulf %19, %18 : vector<8x128xf32>
    %21 = arith.subf %12, %0 : vector<8x128xf32>
    %22 = arith.mulf %20, %21 : vector<8x128xf32>
    %23 = arith.addf %0, %22 : vector<8x128xf32>
    %24 = arith.truncf %23 : vector<8x128xf32> to vector<8x128xbf16>
    %c1 = arith.constant 1 : index
    %c0_10 = arith.constant 0 : index
    %c0_11 = arith.constant 0 : index
    %25 = vector.load %arg2[%c1, %c0_10, %c0_11] : memref<4x128x256xbf16, #tpu.memory_space<vmem>>, vector<1x128x256xbf16>
    %26 = vector.shape_cast %25 : vector<1x128x256xbf16> to vector<128x256xbf16>
    %cst_12 = arith.constant dense<0.000000e+00> : vector<8x256xf32>
    %27 = tpu.matmul %24, %26, %cst_12 {dimension_numbers = #tpu.dot_dimension_numbers<[1], [0], [0], [1], [0, 0, 1, 1], [], []>} : vector<8x128xbf16>, vector<128x256xbf16>, vector<8x256xf32> -> vector<8x256xf32>
    %c1_13 = arith.constant 1 : index
    %c0_14 = arith.constant 0 : index
    %28 = vector.load %arg3[%c1_13, %c0_14] : memref<4x256xf32, #tpu.memory_space<vmem>>, vector<1x256xf32>
    %29 = vector.shape_cast %28 : vector<1x256xf32> to vector<256xf32>
    %30 = vector.shape_cast %29 : vector<256xf32> to vector<1x256xf32>
    %31 = vector.broadcast %30 : vector<1x256xf32> to vector<8x256xf32>
    %32 = arith.addf %27, %31 : vector<8x256xf32>
    %33 = vector.extract_strided_slice %32 {offsets = [0, 0], sizes = [8, 128], strides = [1, 1]} : vector<8x256xf32> to vector<8x128xf32>
    %cst_15 = arith.constant 0.000000e+00 : f32
    %34 = vector.broadcast %cst_15 : f32 to vector<8x128xf32>
    %35 = arith.maximumf %33, %34 : vector<8x128xf32>
    %36 = vector.extract_strided_slice %32 {offsets = [0, 128], sizes = [8, 128], strides = [1, 1]} : vector<8x256xf32> to vector<8x128xf32>
    %cst_16 = arith.constant 5.000000e-01 : f32
    %37 = vector.broadcast %cst_16 : f32 to vector<8x128xf32>
    %38 = arith.mulf %37, %36 : vector<8x128xf32>
    %39 = math.tanh %38 : vector<8x128xf32>
    %cst_17 = arith.constant 1.000000e+00 : f32
    %40 = vector.broadcast %cst_17 : f32 to vector<8x128xf32>
    %41 = arith.addf %40, %39 : vector<8x128xf32>
    %cst_18 = arith.constant 5.000000e-01 : f32
    %42 = vector.broadcast %cst_18 : f32 to vector<8x128xf32>
    %43 = arith.mulf %42, %41 : vector<8x128xf32>
    %44 = arith.subf %35, %23 : vector<8x128xf32>
    %45 = arith.mulf %43, %44 : vector<8x128xf32>
    %46 = arith.addf %23, %45 : vector<8x128xf32>
    %47 = arith.truncf %46 : vector<8x128xf32> to vector<8x128xbf16>
    %c2 = arith.constant 2 : index
    %c0_19 = arith.constant 0 : index
    %c0_20 = arith.constant 0 : index
    %48 = vector.load %arg2[%c2, %c0_19, %c0_20] : memref<4x128x256xbf16, #tpu.memory_space<vmem>>, vector<1x128x256xbf16>
    %49 = vector.shape_cast %48 : vector<1x128x256xbf16> to vector<128x256xbf16>
    %cst_21 = arith.constant dense<0.000000e+00> : vector<8x256xf32>
    %50 = tpu.matmul %47, %49, %cst_21 {dimension_numbers = #tpu.dot_dimension_numbers<[1], [0], [0], [1], [0, 0, 1, 1], [], []>} : vector<8x128xbf16>, vector<128x256xbf16>, vector<8x256xf32> -> vector<8x256xf32>
    %c2_22 = arith.constant 2 : index
    %c0_23 = arith.constant 0 : index
    %51 = vector.load %arg3[%c2_22, %c0_23] : memref<4x256xf32, #tpu.memory_space<vmem>>, vector<1x256xf32>
    %52 = vector.shape_cast %51 : vector<1x256xf32> to vector<256xf32>
    %53 = vector.shape_cast %52 : vector<256xf32> to vector<1x256xf32>
    %54 = vector.broadcast %53 : vector<1x256xf32> to vector<8x256xf32>
    %55 = arith.addf %50, %54 : vector<8x256xf32>
    %56 = vector.extract_strided_slice %55 {offsets = [0, 0], sizes = [8, 128], strides = [1, 1]} : vector<8x256xf32> to vector<8x128xf32>
    %cst_24 = arith.constant 0.000000e+00 : f32
    %57 = vector.broadcast %cst_24 : f32 to vector<8x128xf32>
    %58 = arith.maximumf %56, %57 : vector<8x128xf32>
    %59 = vector.extract_strided_slice %55 {offsets = [0, 128], sizes = [8, 128], strides = [1, 1]} : vector<8x256xf32> to vector<8x128xf32>
    %cst_25 = arith.constant 5.000000e-01 : f32
    %60 = vector.broadcast %cst_25 : f32 to vector<8x128xf32>
    %61 = arith.mulf %60, %59 : vector<8x128xf32>
    %62 = math.tanh %61 : vector<8x128xf32>
    %cst_26 = arith.constant 1.000000e+00 : f32
    %63 = vector.broadcast %cst_26 : f32 to vector<8x128xf32>
    %64 = arith.addf %63, %62 : vector<8x128xf32>
    %cst_27 = arith.constant 5.000000e-01 : f32
    %65 = vector.broadcast %cst_27 : f32 to vector<8x128xf32>
    %66 = arith.mulf %65, %64 : vector<8x128xf32>
    %67 = arith.subf %58, %46 : vector<8x128xf32>
    %68 = arith.mulf %66, %67 : vector<8x128xf32>
    %69 = arith.addf %46, %68 : vector<8x128xf32>
    %70 = arith.truncf %69 : vector<8x128xf32> to vector<8x128xbf16>
    %c3 = arith.constant 3 : index
    %c0_28 = arith.constant 0 : index
    %c0_29 = arith.constant 0 : index
    %71 = vector.load %arg2[%c3, %c0_28, %c0_29] : memref<4x128x256xbf16, #tpu.memory_space<vmem>>, vector<1x128x256xbf16>
    %72 = vector.shape_cast %71 : vector<1x128x256xbf16> to vector<128x256xbf16>
    %cst_30 = arith.constant dense<0.000000e+00> : vector<8x256xf32>
    %73 = tpu.matmul %70, %72, %cst_30 {dimension_numbers = #tpu.dot_dimension_numbers<[1], [0], [0], [1], [0, 0, 1, 1], [], []>} : vector<8x128xbf16>, vector<128x256xbf16>, vector<8x256xf32> -> vector<8x256xf32>
    %c3_31 = arith.constant 3 : index
    %c0_32 = arith.constant 0 : index
    %74 = vector.load %arg3[%c3_31, %c0_32] : memref<4x256xf32, #tpu.memory_space<vmem>>, vector<1x256xf32>
    %75 = vector.shape_cast %74 : vector<1x256xf32> to vector<256xf32>
    %76 = vector.shape_cast %75 : vector<256xf32> to vector<1x256xf32>
    %77 = vector.broadcast %76 : vector<1x256xf32> to vector<8x256xf32>
    %78 = arith.addf %73, %77 : vector<8x256xf32>
    %79 = vector.extract_strided_slice %78 {offsets = [0, 0], sizes = [8, 128], strides = [1, 1]} : vector<8x256xf32> to vector<8x128xf32>
    %cst_33 = arith.constant 0.000000e+00 : f32
    %80 = vector.broadcast %cst_33 : f32 to vector<8x128xf32>
    %81 = arith.maximumf %79, %80 : vector<8x128xf32>
    %82 = vector.extract_strided_slice %78 {offsets = [0, 128], sizes = [8, 128], strides = [1, 1]} : vector<8x256xf32> to vector<8x128xf32>
    %cst_34 = arith.constant 5.000000e-01 : f32
    %83 = vector.broadcast %cst_34 : f32 to vector<8x128xf32>
    %84 = arith.mulf %83, %82 : vector<8x128xf32>
    %85 = math.tanh %84 : vector<8x128xf32>
    %cst_35 = arith.constant 1.000000e+00 : f32
    %86 = vector.broadcast %cst_35 : f32 to vector<8x128xf32>
    %87 = arith.addf %86, %85 : vector<8x128xf32>
    %cst_36 = arith.constant 5.000000e-01 : f32
    %88 = vector.broadcast %cst_36 : f32 to vector<8x128xf32>
    %89 = arith.mulf %88, %87 : vector<8x128xf32>
    %90 = arith.subf %81, %69 : vector<8x128xf32>
    %91 = arith.mulf %89, %90 : vector<8x128xf32>
    %92 = arith.addf %69, %91 : vector<8x128xf32>
    %c0_37 = arith.constant 0 : index
    %c0_38 = arith.constant 0 : index
    %93 = vector.load %arg4[%c0_37, %c0_38] : memref<8x128xf32, #tpu.memory_space<vmem>>, vector<8x128xf32>
    tpu.vector_store %arg4[%c0_37, %c0_38], %92 {strides = array<i32>} : memref<8x128xf32, #tpu.memory_space<vmem>>, vector<8x128xf32>,
    return
  }
  func.func @transform_0(%arg0: i32) -> (i32, i32) {
    %c0_i32 = arith.constant 0 : i32
    %c0_i32_0 = arith.constant 0 : i32
    return %arg0, %c0_i32 : i32, i32
  }
  func.func @transform_1(%arg0: i32) -> (i32, i32, i32) {
    %c0_i32 = arith.constant 0 : i32
    %c0_i32_0 = arith.constant 0 : i32
    %c0_i32_1 = arith.constant 0 : i32
    %c0_i32_2 = arith.constant 0 : i32
    return %c0_i32, %c0_i32_0, %c0_i32_1 : i32, i32, i32
  }
  func.func @transform_2(%arg0: i32) -> (i32, i32) {
    %c0_i32 = arith.constant 0 : i32
    %c0_i32_0 = arith.constant 0 : i32
    %c0_i32_1 = arith.constant 0 : i32
    return %c0_i32, %c0_i32_0 : i32, i32
  }
  func.func @transform_3(%arg0: i32) -> (i32, i32) {
    %c0_i32 = arith.constant 0 : i32
    %c0_i32_0 = arith.constant 0 : i32
    return %arg0, %c0_i32 : i32, i32
  }
}

module attributes {stable_mosaic.version = 11 : i64} {
  func.func @highway_kernel(%arg0: i32, %arg1: memref<8x128xf32, #tpu.memory_space<vmem>>, %arg2: memref<4x128x256xbf16, #tpu.memory_space<vmem>>, %arg3: memref<4x256xf32, #tpu.memory_space<vmem>>, %arg4: memref<8x128xf32, #tpu.memory_space<vmem>>) attributes {dimension_semantics = [#tpu.dimension_semantics<parallel>], iteration_bounds = array<i64: 2>, scalar_prefetch = 0 : i64, scratch_operands = 0 : i64, tpu.core_type = #tpu.core_type<tc>, window_params = [{transform_indices = @transform_0, window_bounds = array<i64: 8, 128>}, {pipeline_mode = #tpu.pipeline_mode<synchronous>, transform_indices = @transform_1, window_bounds = array<i64: 4, 128, 256>}, {pipeline_mode = #tpu.pipeline_mode<synchronous>, transform_indices = @transform_2, window_bounds = array<i64: 4, 256>}, {transform_indices = @transform_3, window_bounds = array<i64: 8, 128>}]} {
    %c0 = arith.constant 0 : index
    %c0_0 = arith.constant 0 : index
    %0 = vector.load %arg1[%c0, %c0_0] : memref<8x128xf32, #tpu.memory_space<vmem>>, vector<8x128xf32>
    %1 = arith.truncf %0 : vector<8x128xf32> to vector<8x128xbf16>
    %c0_1 = arith.constant 0 : index
    %c0_2 = arith.constant 0 : index
    %c0_3 = arith.constant 0 : index
    %2 = vector.load %arg2[%c0_1, %c0_2, %c0_3] : memref<4x128x256xbf16, #tpu.memory_space<vmem>>, vector<1x128x256xbf16>
    %3 = vector.shape_cast %2 : vector<1x128x256xbf16> to vector<128x256xbf16>
    %cst = arith.constant dense<0.000000e+00> : vector<8x256xf32>
    %4 = tpu.matmul %1, %3, %cst {dimension_numbers = #tpu.dot_dimension_numbers<[1], [0], [0], [1], [0, 0, 1, 1], [], []>} : vector<8x128xbf16>, vector<128x256xbf16>, vector<8x256xf32> -> vector<8x256xf32>
    %c0_4 = arith.constant 0 : index
    %c0_5 = arith.constant 0 : index
    %5 = vector.load %arg3[%c0_4, %c0_5] : memref<4x256xf32, #tpu.memory_space<vmem>>, vector<1x256xf32>
    %6 = vector.shape_cast %5 : vector<1x256xf32> to vector<256xf32>
    %7 = vector.shape_cast %6 : vector<256xf32> to vector<1x256xf32>
    %8 = vector.broadcast %7 : vector<1x256xf32> to vector<8x256xf32>
    %9 = arith.addf %4, %8 : vector<8x256xf32>
    %10 = vector.extract_strided_slice %9 {offsets = [0, 0], sizes = [8, 128], strides = [1, 1]} : vector<8x256xf32> to vector<8x128xf32>
    %cst_6 = arith.constant 0.000000e+00 : f32
    %11 = vector.broadcast %cst_6 : f32 to vector<8x128xf32>
    %12 = arith.maximumf %10, %11 : vector<8x128xf32>
    %13 = vector.extract_strided_slice %9 {offsets = [0, 128], sizes = [8, 128], strides = [1, 1]} : vector<8x256xf32> to vector<8x128xf32>
    %cst_7 = arith.constant 5.000000e-01 : f32
    %14 = vector.broadcast %cst_7 : f32 to vector<8x128xf32>
    %15 = arith.mulf %14, %13 : vector<8x128xf32>
    %16 = math.tanh %15 : vector<8x128xf32>
    %cst_8 = arith.constant 1.000000e+00 : f32
    %17 = vector.broadcast %cst_8 : f32 to vector<8x128xf32>
    %18 = arith.addf %17, %16 : vector<8x128xf32>
    %cst_9 = arith.constant 5.000000e-01 : f32
    %19 = vector.broadcast %cst_9 : f32 to vector<8x128xf32>
    %20 = arith.mulf %19, %18 : vector<8x128xf32>
    %21 = arith.subf %12, %0 : vector<8x128xf32>
    %22 = arith.mulf %20, %21 : vector<8x128xf32>
    %23 = arith.addf %0, %22 : vector<8x128xf32>
    %24 = arith.truncf %23 : vector<8x128xf32> to vector<8x128xbf16>
    %c1 = arith.constant 1 : index
    %c0_10 = arith.constant 0 : index
    %c0_11 = arith.constant 0 : index
    %25 = vector.load %arg2[%c1, %c0_10, %c0_11] : memref<4x128x256xbf16, #tpu.memory_space<vmem>>, vector<1x128x256xbf16>
    %26 = vector.shape_cast %25 : vector<1x128x256xbf16> to vector<128x256xbf16>
    %cst_12 = arith.constant dense<0.000000e+00> : vector<8x256xf32>
    %27 = tpu.matmul %24, %26, %cst_12 {dimension_numbers = #tpu.dot_dimension_numbers<[1], [0], [0], [1], [0, 0, 1, 1], [], []>} : vector<8x128xbf16>, vector<128x256xbf16>, vector<8x256xf32> -> vector<8x256xf32>
    %c1_13 = arith.constant 1 : index
    %c0_14 = arith.constant 0 : index
    %28 = vector.load %arg3[%c1_13, %c0_14] : memref<4x256xf32, #tpu.memory_space<vmem>>, vector<1x256xf32>
    %29 = vector.shape_cast %28 : vector<1x256xf32> to vector<256xf32>
    %30 = vector.shape_cast %29 : vector<256xf32> to vector<1x256xf32>
    %31 = vector.broadcast %30 : vector<1x256xf32> to vector<8x256xf32>
    %32 = arith.addf %27, %31 : vector<8x256xf32>
    %33 = vector.extract_strided_slice %32 {offsets = [0, 0], sizes = [8, 128], strides = [1, 1]} : vector<8x256xf32> to vector<8x128xf32>
    %cst_15 = arith.constant 0.000000e+00 : f32
    %34 = vector.broadcast %cst_15 : f32 to vector<8x128xf32>
    %35 = arith.maximumf %33, %34 : vector<8x128xf32>
    %36 = vector.extract_strided_slice %32 {offsets = [0, 128], sizes = [8, 128], strides = [1, 1]} : vector<8x256xf32> to vector<8x128xf32>
    %cst_16 = arith.constant 5.000000e-01 : f32
    %37 = vector.broadcast %cst_16 : f32 to vector<8x128xf32>
    %38 = arith.mulf %37, %36 : vector<8x128xf32>
    %39 = math.tanh %38 : vector<8x128xf32>
    %cst_17 = arith.constant 1.000000e+00 : f32
    %40 = vector.broadcast %cst_17 : f32 to vector<8x128xf32>
    %41 = arith.addf %40, %39 : vector<8x128xf32>
    %cst_18 = arith.constant 5.000000e-01 : f32
    %42 = vector.broadcast %cst_18 : f32 to vector<8x128xf32>
    %43 = arith.mulf %42, %41 : vector<8x128xf32>
    %44 = arith.subf %35, %23 : vector<8x128xf32>
    %45 = arith.mulf %43, %44 : vector<8x128xf32>
    %46 = arith.addf %23, %45 : vector<8x128xf32>
    %47 = arith.truncf %46 : vector<8x128xf32> to vector<8x128xbf16>
    %c2 = arith.constant 2 : index
    %c0_19 = arith.constant 0 : index
    %c0_20 = arith.constant 0 : index
    %48 = vector.load %arg2[%c2, %c0_19, %c0_20] : memref<4x128x256xbf16, #tpu.memory_space<vmem>>, vector<1x128x256xbf16>
    %49 = vector.shape_cast %48 : vector<1x128x256xbf16> to vector<128x256xbf16>
    %cst_21 = arith.constant dense<0.000000e+00> : vector<8x256xf32>
    %50 = tpu.matmul %47, %49, %cst_21 {dimension_numbers = #tpu.dot_dimension_numbers<[1], [0], [0], [1], [0, 0, 1, 1], [], []>} : vector<8x128xbf16>, vector<128x256xbf16>, vector<8x256xf32> -> vector<8x256xf32>
    %c2_22 = arith.constant 2 : index
    %c0_23 = arith.constant 0 : index
    %51 = vector.load %arg3[%c2_22, %c0_23] : memref<4x256xf32, #tpu.memory_space<vmem>>, vector<1x256xf32>
    %52 = vector.shape_cast %51 : vector<1x256xf32> to vector<256xf32>
    %53 = vector.shape_cast %52 : vector<256xf32> to vector<1x256xf32>
    %54 = vector.broadcast %53 : vector<1x256xf32> to vector<8x256xf32>
    %55 = arith.addf %50, %54 : vector<8x256xf32>
    %56 = vector.extract_strided_slice %55 {offsets = [0, 0], sizes = [8, 128], strides = [1, 1]} : vector<8x256xf32> to vector<8x128xf32>
    %cst_24 = arith.constant 0.000000e+00 : f32
    %57 = vector.broadcast %cst_24 : f32 to vector<8x128xf32>
    %58 = arith.maximumf %56, %57 : vector<8x128xf32>
    %59 = vector.extract_strided_slice %55 {offsets = [0, 128], sizes = [8, 128], strides = [1, 1]} : vector<8x256xf32> to vector<8x128xf32>
    %cst_25 = arith.constant 5.000000e-01 : f32
    %60 = vector.broadcast %cst_25 : f32 to vector<8x128xf32>
    %61 = arith.mulf %60, %59 : vector<8x128xf32>
    %62 = math.tanh %61 : vector<8x128xf32>
    %cst_26 = arith.constant 1.000000e+00 : f32
    %63 = vector.broadcast %cst_26 : f32 to vector<8x128xf32>
    %64 = arith.addf %63, %62 : vector<8x128xf32>
    %cst_27 = arith.constant 5.000000e-01 : f32
    %65 = vector.broadcast %cst_27 : f32 to vector<8x128xf32>
    %66 = arith.mulf %65, %64 : vector<8x128xf32>
    %67 = arith.subf %58, %46 : vector<8x128xf32>
    %68 = arith.mulf %66, %67 : vector<8x128xf32>
    %69 = arith.addf %46, %68 : vector<8x128xf32>
    %70 = arith.truncf %69 : vector<8x128xf32> to vector<8x128xbf16>
    %c3 = arith.constant 3 : index
    %c0_28 = arith.constant 0 : index
    %c0_29 = arith.constant 0 : index
    %71 = vector.load %arg2[%c3, %c0_28, %c0_29] : memref<4x128x256xbf16, #tpu.memory_space<vmem>>, vector<1x128x256xbf16>
    %72 = vector.shape_cast %71 : vector<1x128x256xbf16> to vector<128x256xbf16>
    %cst_30 = arith.constant dense<0.000000e+00> : vector<8x256xf32>
    %73 = tpu.matmul %70, %72, %cst_30 {dimension_numbers = #tpu.dot_dimension_numbers<[1], [0], [0], [1], [0, 0, 1, 1], [], []>} : vector<8x128xbf16>, vector<128x256xbf16>, vector<8x256xf32> -> vector<8x256xf32>
    %c3_31 = arith.constant 3 : index
    %c0_32 = arith.constant 0 : index
    %74 = vector.load %arg3[%c3_31, %c0_32] : memref<4x256xf32, #tpu.memory_space<vmem>>, vector<1x256xf32>
    %75 = vector.shape_cast %74 : vector<1x256xf32> to vector<256xf32>
    %76 = vector.shape_cast %75 : vector<256xf32> to vector<1x256xf32>
    %77 = vector.broadcast %76 : vector<1x256xf32> to vector<8x256xf32>
    %78 = arith.addf %73, %77 : vector<8x256xf32>
    %79 = vector.extract_strided_slice %78 {offsets = [0, 0], sizes = [8, 128], strides = [1, 1]} : vector<8x256xf32> to vector<8x128xf32>
    %cst_33 = arith.constant 0.000000e+00 : f32
    %80 = vector.broadcast %cst_33 : f32 to vector<8x128xf32>
    %81 = arith.maximumf %79, %80 : vector<8x128xf32>
    %82 = vector.extract_strided_slice %78 {offsets = [0, 128], sizes = [8, 128], strides = [1, 1]} : vector<8x256xf32> to vector<8x128xf32>
    %cst_34 = arith.constant 5.000000e-01 : f32
    %83 = vector.broadcast %cst_34 : f32 to vector<8x128xf32>
    %84 = arith.mulf %83, %82 : vector<8x128xf32>
    %85 = math.tanh %84 : vector<8x128xf32>
    %cst_35 = arith.constant 1.000000e+00 : f32
    %86 = vector.broadcast %cst_35 : f32 to vector<8x128xf32>
    %87 = arith.addf %86, %85 : vector<8x128xf32>
    %cst_36 = arith.constant 5.000000e-01 : f32
    %88 = vector.broadcast %cst_36 : f32 to vector<8x128xf32>
    %89 = arith.mulf %88, %87 : vector<8x128xf32>
    %90 = arith.subf %81, %69 : vector<8x128xf32>
    %91 = arith.mulf %89, %90 : vector<8x128xf32>
    %92 = arith.addf %69, %91 : vector<8x128xf32>
    %c0_37 = arith.constant 0 : index
    %c0_38 = arith.constant 0 : index
    %93 = vector.load %arg4[%c0_37, %c0_38] : memref<8x128xf32, #tpu.memory_space<vmem>>, vector<8x128xf32>
    tpu.vector_store %arg4[%c0_37, %c0_38], %92 {strides = array<i32>} : memref<8x128xf32, #tpu.memory_space<vmem>>, vector<8x128xf32>,
    return
  }
  func.func @transform_0(%arg0: i32) -> (i32, i32) {
    %c0_i32 = arith.constant 0 : i32
    %c0_i32_0 = arith.constant 0 : i32
    return %arg0, %c0_i32 : i32, i32
  }
  func.func @transform_1(%arg0: i32) -> (i32, i32, i32) {
    %c0_i32 = arith.constant 0 : i32
    %c0_i32_0 = arith.constant 0 : i32
    %c0_i32_1 = arith.constant 0 : i32
    %c0_i32_2 = arith.constant 0 : i32
    return %c0_i32, %c0_i32_0, %c0_i32_1 : i32, i32, i32
  }
  func.func @transform_2(%arg0: i32) -> (i32, i32) {
    %c0_i32 = arith.constant 0 : i32
    %c0_i32_0 = arith.constant 0 : i32
    %c0_i32_1 = arith.constant 0 : i32
    return %c0_i32, %c0_i32_0 : i32, i32
  }
  func.func @transform_3(%arg0: i32) -> (i32, i32) {
    %c0_i32 = arith.constant 0 : i32
    %c0_i32_0 = arith.constant 0 : i32
    return %arg0, %c0_i32 : i32, i32
  }
}

</mosaic_0001>

<llo_original>
// kernel: tpu_custom_call.1
$region0: #{tpu_custom_call.1}
  #allocation0 [shape = 'u32[]', space=smem, size = 0x4, offset = 0x4, fixed_abs, tag = 'smem constant byte address 0x4 - core index']
  #allocation1 [shape = 'u32[144,128]{1,0:T(1,128)}', space=vmem, size = 0x12000, scoped, tag = 'internal scratch']
  %s0 = inlined_call_operand.hbm [shape: f32[16,128], index: 0, kind: input, shape index: {}]
  %s1 = inlined_call_operand.hbm [shape: bf16[4,128,256], index: 1, kind: input, shape index: {}]
  %s2 = inlined_call_operand.hbm [shape: f32[4,256], index: 2, kind: input, shape index: {}]
  %s3 = inlined_call_operand.hbm [shape: f32[16,128], index: 3, kind: output, shape index: {}]
  %s4 = sld [smem:[#allocation0]]
  $region57: #{tpu_custom_call.1} parent=0
    _
  %s6 = ssub.s32 1, %s4
  %s7 = scalar_select 0, %s6, %s4
  $region1: #{tpu_custom_call.1} parent=0
    #allocation2 [shape = 'u8[8192]{0}', space=vmem, size = 0x2000, scoped, tag = 'input window, operand 0']
    #allocation3 [shape = 's32[2]{0}', space=sflag, size = 0x8, scoped, tag = 'scoped memory for tpu_custom_call.1']
    #allocation4 [shape = 's32[2]{0}', space=sflag, size = 0x8, scoped, tag = 'scoped memory for tpu_custom_call.1']
    #allocation5 [shape = 'u8[262144]{0}', space=vmem, size = 0x40000, scoped, tag = 'input window, operand 1, single buffered']
    #allocation6 [shape = 's32[1]{0}', space=sflag, size = 0x4, scoped, tag = 'scoped memory for tpu_custom_call.1']
    #allocation7 [shape = 'u8[4096]{0}', space=vmem, size = 0x1000, scoped, tag = 'input window, operand 2, single buffered']
    #allocation8 [shape = 'u8[8192]{0}', space=vmem, size = 0x2000, scoped, tag = 'output window, operand 0']
    %8 = vsyncpa [#allocation3], 0
    %s9 = scalar_lea.sflag [#allocation3], 1
    %10 = vsyncpa %s9, 0
    %11 = vsyncpa [#allocation6], 0
    %12 = vsyncpa [#allocation4], 0
    %s13 = scalar_lea.sflag [#allocation4], 1
    %14 = vsyncpa %s13, 0
    loop: start=0, step=1, limit=4
    $region2: #{tpu_custom_call.1} parent=1 // loop_pre_header
      _
    $region3: #{tpu_custom_call.1} parent=1 // loop_header
      %s16 = sphi 0, %s20
      %p17 = scmp.ge.s32.totalorder %s16, 4
      %s26 = sphi 0, %s28
      %s29 = sphi 0, %s26
      %s30 = sphi 0, %s29
      %s46 = sphi 0, %s30
      %s50 = sphi 0, %s50
      %s52 = sphi 0, %s50
      %s53 = sphi 0, %s52
      %s67 = sphi 0, %s53
      %s71 = sphi 0, %s71
      %s73 = sphi 0, %s71
      %s74 = sphi 0, %s73
      %s88 = sphi 0, %s74
      %s94 = sphi 0, %s96
      %s97 = sphi 0, %s94
      %s98 = sphi 0, %s97
      %s114 = sphi 0, %s98
    $region4: #{tpu_custom_call.1} parent=1 // loop_header_branch
      %19 = sbr.rel (%p17) target = $region8
    $region5: #{tpu_custom_call.1} parent=1 // loop_body
      %s21 = ssub.s32 %s16, 1
      %s22 = ssub.s32 %s16, 2
      %s23 = sadd.s32 %s16, 1
      %s24 = ssub.s32 %s16, %s23
      %p25 = scmp.eq.s32.totalorder %s24, 0
      %s27 = sadd.s32 %s26, 1
      %s28 = scalar_select %p25, %s26, %s27
      %p31 = pneg %p25
      %p32 = scmp.eq.s32.totalorder %s16, 1
      %p33 = por %p31, %p32
      %p34 = scmp.ne.s32.totalorder %s26, %s29
      %p35 = scmp.eq.s32.totalorder %s16, 0
      %p36 = por %p34, %p35
      %p37 = scmp.ne.s32.totalorder %s26, %s29
      %p38 = scmp.eq.s32.totalorder %s21, 1
      %p39 = por %p37, %p38
      %p40 = scmp.ne.s32.totalorder %s29, %s30
      %p41 = scmp.eq.s32.totalorder %s21, 0
      %p42 = por %p40, %p41
      %p43 = scmp.ne.s32.totalorder %s29, %s30
      %p44 = scmp.eq.s32.totalorder %s22, 1
      %p45 = por %p43, %p44
      %p47 = scmp.ne.s32.totalorder %s30, %s46
      %p48 = scmp.eq.s32.totalorder %s22, 0
      %p49 = por %p47, %p48
      %s51 = sadd.s32 %s50, 1
      %p54 = scmp.eq.s32.totalorder %s16, 1
      %p55 = scmp.ne.s32.totalorder %s50, %s52
      %p56 = scmp.eq.s32.totalorder %s16, 0
      %p57 = por %p55, %p56
      %p58 = scmp.ne.s32.totalorder %s50, %s52
      %p59 = scmp.eq.s32.totalorder %s21, 1
      %p60 = por %p58, %p59
      %p61 = scmp.ne.s32.totalorder %s52, %s53
      %p62 = scmp.eq.s32.totalorder %s21, 0
      %p63 = por %p61, %p62
      %p64 = scmp.ne.s32.totalorder %s52, %s53
      %p65 = scmp.eq.s32.totalorder %s22, 1
      %p66 = por %p64, %p65
      %p68 = scmp.ne.s32.totalorder %s53, %s67
      %p69 = scmp.eq.s32.totalorder %s22, 0
      %p70 = por %p68, %p69
      %s72 = sadd.s32 %s71, 1
      %p75 = scmp.eq.s32.totalorder %s16, 1
      %p76 = scmp.ne.s32.totalorder %s71, %s73
      %p77 = scmp.eq.s32.totalorder %s16, 0
      %p78 = por %p76, %p77
      %p79 = scmp.ne.s32.totalorder %s71, %s73
      %p80 = scmp.eq.s32.totalorder %s21, 1
      %p81 = por %p79, %p80
      %p82 = scmp.ne.s32.totalorder %s73, %s74
      %p83 = scmp.eq.s32.totalorder %s21, 0
      %p84 = por %p82, %p83
      %p85 = scmp.ne.s32.totalorder %s73, %s74
      %p86 = scmp.eq.s32.totalorder %s22, 1
      %p87 = por %p85, %p86
      %p89 = scmp.ne.s32.totalorder %s74, %s88
      %p90 = scmp.eq.s32.totalorder %s22, 0
      %p91 = por %p89, %p90
      %s92 = ssub.s32 %s16, %s23
      %p93 = scmp.eq.s32.totalorder %s92, 0
      %s95 = sadd.s32 %s94, 1
      %s96 = scalar_select %p93, %s94, %s95
      %p99 = pneg %p93
      %p100 = scmp.eq.s32.totalorder %s16, 1
      %p101 = por %p99, %p100
      %p102 = scmp.ne.s32.totalorder %s94, %s97
      %p103 = scmp.eq.s32.totalorder %s16, 0
      %p104 = por %p102, %p103
      %p105 = scmp.ne.s32.totalorder %s94, %s97
      %p106 = scmp.eq.s32.totalorder %s21, 1
      %p107 = por %p105, %p106
      %p108 = scmp.ne.s32.totalorder %s97, %s98
      %p109 = scmp.eq.s32.totalorder %s21, 0
      %p110 = por %p108, %p109
      %p111 = scmp.ne.s32.totalorder %s97, %s98
      %p112 = scmp.eq.s32.totalorder %s22, 1
      %p113 = por %p111, %p112
      %p115 = scmp.ne.s32.totalorder %s98, %s114
      %p116 = scmp.eq.s32.totalorder %s22, 0
      %p117 = por %p115, %p116
      %p118 = scmp.le.s32.totalorder 1, %s16
      %p119 = scmp.lt.s32.totalorder %s16, 3
      %p120 = pnand %p118, %p119
      %p121 = pneg %p120
      // Predicated region
      $region9: #{tpu_custom_call.1} parent=5 // pred_check
        _
      $region10: #{tpu_custom_call.1} parent=5 // pred_check_branch
        %123 = sbr.rel (%p120) target = $region12
      $region11: #{tpu_custom_call.1} parent=5 // pred_region
        %s124 = ssub.s32 %s16, 1
        // Predicated region
        $region13: #{tpu_custom_call.1} parent=11 // pred_check
          %p125 = pneg %p63
        $region14: #{tpu_custom_call.1} parent=11 // pred_check_branch
          %127 = sbr.rel (%p125) target = $region16
        $region15: #{tpu_custom_call.1} parent=11 // pred_region
          %s129 = ssub.s32 8192, 8192
          %130 = vsyncadd [#allocation6], %s129
          %s131 = sshll.u32 [#allocation5], 4
          %s132 = int_to_ptr.vmem [resolvable:$true] %s131
          %137 = dma.hbm_to_vmem [thread:$0]  %s1, 8192, %s132, [#allocation6], 128, 128, 8
        $region16: #{tpu_custom_call.1} parent=11 // pred_fallthru
          _
        // Predicated region
        $region17: #{tpu_custom_call.1} parent=11 // pred_check
          %p138 = pneg %p84
        $region18: #{tpu_custom_call.1} parent=11 // pred_check_branch
          %140 = sbr.rel (%p138) target = $region20
        $region19: #{tpu_custom_call.1} parent=11 // pred_region
          %s142 = ssub.s32 128, 128
          %143 = vsyncadd [#allocation6], %s142
          %s145 = sshll.u32 [#allocation7], 4
          %s146 = int_to_ptr.vmem [resolvable:$true] %s145
          %148 = dma.hbm_to_vmem [thread:$0]  %s2, 128, %s146, [#allocation6]
        $region20: #{tpu_custom_call.1} parent=11 // pred_fallthru
          _
      $region12: #{tpu_custom_call.1} parent=5 // pred_fallthru
        _
      %p149 = scmp.lt.s32.totalorder %s16, 2
      // Predicated region
      $region21: #{tpu_custom_call.1} parent=5 // pred_check
        %p150 = pneg %p149
      $region22: #{tpu_custom_call.1} parent=5 // pred_check_branch
        %152 = sbr.rel (%p150) target = $region24
      $region23: #{tpu_custom_call.1} parent=5 // pred_region
        // Predicated region
        $region25: #{tpu_custom_call.1} parent=23 // pred_check
          %p153 = pneg %p36
        $region26: #{tpu_custom_call.1} parent=23 // pred_check_branch
          %155 = sbr.rel (%p153) target = $region28
        $region27: #{tpu_custom_call.1} parent=23 // pred_region
          %s156 = sand.u32 %s26, 1
          %s157 = scalar_lea.sflag [#allocation3], %s156
          %s158 = sand.u32 %s26, 1
          %s159 = smul.addr %s158, 8
          %s160 = scalar_lea.vmem [#allocation2], %s159
          %s162 = ssub.s32 128, 128
          %163 = vsyncadd %s157, %s162
          %s164 = smul.addr %s16, 128
          %s165 = scalar_lea.hbm %s0, %s164
          %s167 = sshll.u32 %s160, 4
          %s168 = int_to_ptr.vmem [resolvable:$true] %s167
          %170 = dma.hbm_to_vmem [thread:$0]  %s165, 128, %s168, %s157
        $region28: #{tpu_custom_call.1} parent=23 // pred_fallthru
          _
      $region24: #{tpu_custom_call.1} parent=5 // pred_fallthru
        _
      %p171 = scmp.le.s32.totalorder 1, %s16
      %p172 = scmp.lt.s32.totalorder %s16, 3
      %p173 = pnand %p171, %p172
      %p174 = pneg %p173
      // Predicated region
      $region29: #{tpu_custom_call.1} parent=5 // pred_check
        _
      $region30: #{tpu_custom_call.1} parent=5 // pred_check_branch
        %176 = sbr.rel (%p173) target = $region32
      $region31: #{tpu_custom_call.1} parent=5 // pred_region
        %s177 = ssub.s32 %s16, 1
        %s178 = sand.u32 %s29, 1
        %s179 = scalar_lea.sflag [#allocation3], %s178
        %s180 = sand.u32 %s29, 1
        %s181 = smul.addr %s180, 8
        %s182 = scalar_lea.vmem [#allocation2], %s181
        // Predicated region
        $region33: #{tpu_custom_call.1} parent=31 // pred_check
          %p183 = pneg %p42
        $region34: #{tpu_custom_call.1} parent=31 // pred_check_branch
          %185 = sbr.rel (%p183) target = $region36
        $region35: #{tpu_custom_call.1} parent=31 // pred_region
          %186 = dma.done %s179, 128
        $region36: #{tpu_custom_call.1} parent=31 // pred_fallthru
          _
        // Predicated region
        $region37: #{tpu_custom_call.1} parent=31 // pred_check
          %p187 = pneg %p63
        $region38: #{tpu_custom_call.1} parent=31 // pred_check_branch
          %189 = sbr.rel (%p187) target = $region40
        $region39: #{tpu_custom_call.1} parent=31 // pred_region
          %190 = dma.done [#allocation6], 8192
        $region40: #{tpu_custom_call.1} parent=31 // pred_fallthru
          _
        // Predicated region
        $region41: #{tpu_custom_call.1} parent=31 // pred_check
          %p191 = pneg %p84
        $region42: #{tpu_custom_call.1} parent=31 // pred_check_branch
          %193 = sbr.rel (%p191) target = $region44
        $region43: #{tpu_custom_call.1} parent=31 // pred_region
          %194 = dma.done [#allocation6], 128
        $region44: #{tpu_custom_call.1} parent=31 // pred_fallthru
          _
        %s195 = sand.u32 %s29, 1
        %s196 = scalar_lea.sflag [#allocation3], %s195
        %s197 = sand.u32 %s29, 1
        %s198 = smul.addr %s197, 8
        %s199 = scalar_lea.vmem [#allocation2], %s198
        %p200 = pneg %p42
        %p201 = pneg %p39
        %p202 = pneg %p63
        %p203 = pneg %p60
        %p204 = pneg %p84
        %p205 = pneg %p81
        %p206 = pneg %p110
        %p207 = pneg %p107
        %s208 = sand.u32 %s97, 1
        %s209 = scalar_lea.sflag [#allocation4], %s208
        %s210 = sand.u32 %s97, 1
        %s211 = smul.addr %s210, 8
        %s212 = scalar_lea.vmem [#allocation8], %s211
        %v214 = vld [vmem:[%s182] sm:$0xff]
        %v215 = vpack.c.bf16 %v214, %v214
        %v216 = vld [vmem:[#allocation5] sm:$0xff]
        %v217 = vld [vmem:[#allocation5 + $0x8] sm:$0xff]
        %v218 = vld [vmem:[#allocation5 + $0x10] sm:$0xff]
        %v219 = vld [vmem:[#allocation5 + $0x18] sm:$0xff]
        %v220 = vld [vmem:[#allocation5 + $0x20] sm:$0xff]
        %v221 = vld [vmem:[#allocation5 + $0x28] sm:$0xff]
        %v222 = vld [vmem:[#allocation5 + $0x30] sm:$0xff]
        %v223 = vld [vmem:[#allocation5 + $0x38] sm:$0xff]
        %v224 = vld [vmem:[#allocation5 + $0x40] sm:$0xff]
        %v225 = vld [vmem:[#allocation5 + $0x48] sm:$0xff]
        %v226 = vld [vmem:[#allocation5 + $0x50] sm:$0xff]
        %v227 = vld [vmem:[#allocation5 + $0x58] sm:$0xff]
        %v228 = vld [vmem:[#allocation5 + $0x60] sm:$0xff]
        %v229 = vld [vmem:[#allocation5 + $0x68] sm:$0xff]
        %v230 = vld [vmem:[#allocation5 + $0x70] sm:$0xff]
        %v231 = vld [vmem:[#allocation5 + $0x78] sm:$0xff]
        %v232 = vld [vmem:[#allocation7] ss:$4 sm:$0x3]
        %v234 = vlaneseq
        %v235 = vshrl.u32 %v234, 7
        %v236 = vsub.s32 0, %v235
        %v237 = vrot.slane %v232, %v236
        %v238 = vlaneseq
        %v239 = vshrl.u32 %v238, 7
        %v240 = vsub.s32 1, %v239
        %v241 = vrot.slane %v232, %v240
        %v260 = vunpack.c.l.b16 %v216
        %v261 = vunpack.c.h.b16 %v216
        %v262 = vunpack.c.l.b16 %v217
        %v263 = vunpack.c.h.b16 %v217
        %v264 = vunpack.c.l.b16 %v218
        %v265 = vunpack.c.h.b16 %v218
        %v266 = vunpack.c.l.b16 %v219
        %v267 = vunpack.c.h.b16 %v219
        %v268 = vunpack.c.l.b16 %v220
        %v269 = vunpack.c.h.b16 %v220
        %v270 = vunpack.c.l.b16 %v221
        %v271 = vunpack.c.h.b16 %v221
        %v272 = vunpack.c.l.b16 %v222
        %v273 = vunpack.c.h.b16 %v222
        %v274 = vunpack.c.l.b16 %v223
        %v275 = vunpack.c.h.b16 %v223
        %v276 = vunpack.c.l.b16 %v224
        %v277 = vunpack.c.h.b16 %v224
        %v278 = vunpack.c.l.b16 %v225
        %v279 = vunpack.c.h.b16 %v225
        %v280 = vunpack.c.l.b16 %v226
        %v281 = vunpack.c.h.b16 %v226
        %v282 = vunpack.c.l.b16 %v227
        %v283 = vunpack.c.h.b16 %v227
        %v284 = vunpack.c.l.b16 %v228
        %v285 = vunpack.c.h.b16 %v228
        %v286 = vunpack.c.l.b16 %v229
        %v287 = vunpack.c.h.b16 %v229
        %v288 = vunpack.c.l.b16 %v230
        %v289 = vunpack.c.h.b16 %v230
        %v290 = vunpack.c.l.b16 %v231
        %v291 = vunpack.c.h.b16 %v231
        %v292 = vpack.c.b16 %v262, %v260
        %v293 = vpack.c.b16 %v263, %v261
        %v294 = vpack.c.b16 %v266, %v264
        %v295 = vpack.c.b16 %v267, %v265
        %v296 = vpack.c.b16 %v270, %v268
        %v297 = vpack.c.b16 %v271, %v269
        %v298 = vpack.c.b16 %v274, %v272
        %v299 = vpack.c.b16 %v275, %v273
        %v300 = vpack.c.b16 %v278, %v276
        %v301 = vpack.c.b16 %v279, %v277
        %v302 = vpack.c.b16 %v282, %v280
        %v303 = vpack.c.b16 %v283, %v281
        %v304 = vpack.c.b16 %v286, %v284
        %v305 = vpack.c.b16 %v287, %v285
        %v306 = vpack.c.b16 %v290, %v288
        %v307 = vpack.c.b16 %v291, %v289
        %324 = vmatprep.subr.bf16.mxu0 %v293
        %325 = vmatpush1.bf16.msra.mxu0 %v292
        %326 = vmatprep.subr.bf16.mxu0 %v295
        %327 = vmatpush1.bf16.msra.mxu0 %v294
        %328 = vmatprep.subr.bf16.mxu0 %v297
        %329 = vmatpush1.bf16.msra.mxu0 %v296
        %330 = vmatprep.subr.bf16.mxu0 %v299
        %331 = vmatpush1.bf16.msra.mxu0 %v298
        %332 = vmatprep.subr.bf16.mxu0 %v301
        %333 = vmatpush1.bf16.msra.mxu0 %v300
        %334 = vmatprep.subr.bf16.mxu0 %v303
        %335 = vmatpush1.bf16.msra.mxu0 %v302
        %336 = vmatprep.subr.bf16.mxu0 %v305
        %337 = vmatpush1.bf16.msra.mxu0 %v304
        %338 = vmatprep.subr.bf16.mxu0 %v307
        %339 = vmatpush1.bf16.msra.mxu0 %v306
        %340 = vmatprep.subr.bf16.mxu0 0
        %341 = vmatpush1.bf16.msra.mxu0 0
        %342 = vmatprep.subr.bf16.mxu0 0
        %343 = vmatpush1.bf16.msra.mxu0 0
        %344 = vmatprep.subr.bf16.mxu0 0
        %345 = vmatpush1.bf16.msra.mxu0 0
        %346 = vmatprep.subr.bf16.mxu0 0
        %347 = vmatpush1.bf16.msra.mxu0 0
        %348 = vmatprep.subr.bf16.mxu0 0
        %349 = vmatpush1.bf16.msra.mxu0 0
        %350 = vmatprep.subr.bf16.mxu0 0
        %351 = vmatpush1.bf16.msra.mxu0 0
        %352 = vmatprep.subr.bf16.mxu0 0
        %353 = vmatpush1.bf16.msra.mxu0 0
        %354 = vmatprep.subr.bf16.mxu0 0
        %355 = vmatpush1.bf16.msra.mxu0 0
        %356 = vmatprep.mubr.bf16.mxu0 0
        %357 = vmatmul.mubr.bf16.gmra.mrb[0].mxu0 %v215
        %v358 = vpop.f32.mrb[0].mxu0
        %v359 = vadd.f32 %v237, %v358
        %v360 = vpop.f32.mrb[0].mxu0
        %v361 = vadd.f32 %v241, %v360
        %v362 = vpop.f32.mrb[0].mxu0
        %v363 = vpop.f32.mrb[0].mxu0
        %364 = vdwg.mxu0
        %v365 = vmax.f32 %v359, 0.0
        %v366 = vmul.f32 %v361, 0.5
        %v367 = vtanh.pop %v366
        %v368 = vadd.f32 %v367, 1.0
        %v369 = vmul.f32 %v368, 0.5
        %v370 = vsub.f32 %v365, %v214
        %v371 = vmul.f32 %v369, %v370
        %v372 = vadd.f32 %v214, %v371
        %v373 = vpack.c.bf16 %v372, %v372
        %s374 = scalar_lea.vmem [#allocation5], 128
        %v375 = vld [vmem:[%s374] sm:$0xff]
        %v376 = vld [vmem:[%s374 + $0x8] sm:$0xff]
        %v377 = vld [vmem:[%s374 + $0x10] sm:$0xff]
        %v378 = vld [vmem:[%s374 + $0x18] sm:$0xff]
        %v379 = vld [vmem:[%s374 + $0x20] sm:$0xff]
        %v380 = vld [vmem:[%s374 + $0x28] sm:$0xff]
        %v381 = vld [vmem:[%s374 + $0x30] sm:$0xff]
        %v382 = vld [vmem:[%s374 + $0x38] sm:$0xff]
        %v383 = vld [vmem:[%s374 + $0x40] sm:$0xff]
        %v384 = vld [vmem:[%s374 + $0x48] sm:$0xff]
        %v385 = vld [vmem:[%s374 + $0x50] sm:$0xff]
        %v386 = vld [vmem:[%s374 + $0x58] sm:$0xff]
        %v387 = vld [vmem:[%s374 + $0x60] sm:$0xff]
        %v388 = vld [vmem:[%s374 + $0x68] sm:$0xff]
        %v389 = vld [vmem:[%s374 + $0x70] sm:$0xff]
        %v390 = vld [vmem:[%s374 + $0x78] sm:$0xff]
        %s391 = scalar_lea.vmem [#allocation7], 1
        %v392 = vld [vmem:[%s391] ss:$4 sm:$0x3]
        %v394 = vlaneseq
        %v395 = vshrl.u32 %v394, 7
        %v396 = vsub.s32 0, %v395
        %v397 = vrot.slane %v392, %v396
        %v398 = vlaneseq
        %v399 = vshrl.u32 %v398, 7
        %v400 = vsub.s32 1, %v399
        %v401 = vrot.slane %v392, %v400
        %v420 = vunpack.c.l.b16 %v375
        %v421 = vunpack.c.h.b16 %v375
        %v422 = vunpack.c.l.b16 %v376
        %v423 = vunpack.c.h.b16 %v376
        %v424 = vunpack.c.l.b16 %v377
        %v425 = vunpack.c.h.b16 %v377
        %v426 = vunpack.c.l.b16 %v378
        %v427 = vunpack.c.h.b16 %v378
        %v428 = vunpack.c.l.b16 %v379
        %v429 = vunpack.c.h.b16 %v379
        %v430 = vunpack.c.l.b16 %v380
        %v431 = vunpack.c.h.b16 %v380
        %v432 = vunpack.c.l.b16 %v381
        %v433 = vunpack.c.h.b16 %v381
        %v434 = vunpack.c.l.b16 %v382
        %v435 = vunpack.c.h.b16 %v382
        %v436 = vunpack.c.l.b16 %v383
        %v437 = vunpack.c.h.b16 %v383
        %v438 = vunpack.c.l.b16 %v384
        %v439 = vunpack.c.h.b16 %v384
        %v440 = vunpack.c.l.b16 %v385
        %v441 = vunpack.c.h.b16 %v385
        %v442 = vunpack.c.l.b16 %v386
        %v443 = vunpack.c.h.b16 %v386
        %v444 = vunpack.c.l.b16 %v387
        %v445 = vunpack.c.h.b16 %v387
        %v446 = vunpack.c.l.b16 %v388
        %v447 = vunpack.c.h.b16 %v388
        %v448 = vunpack.c.l.b16 %v389
        %v449 = vunpack.c.h.b16 %v389
        %v450 = vunpack.c.l.b16 %v390
        %v451 = vunpack.c.h.b16 %v390
        %v452 = vpack.c.b16 %v422, %v420
        %v453 = vpack.c.b16 %v423, %v421
        %v454 = vpack.c.b16 %v426, %v424
        %v455 = vpack.c.b16 %v427, %v425
        %v456 = vpack.c.b16 %v430, %v428
        %v457 = vpack.c.b16 %v431, %v429
        %v458 = vpack.c.b16 %v434, %v432
        %v459 = vpack.c.b16 %v435, %v433
        %v460 = vpack.c.b16 %v438, %v436
        %v461 = vpack.c.b16 %v439, %v437
        %v462 = vpack.c.b16 %v442, %v440
        %v463 = vpack.c.b16 %v443, %v441
        %v464 = vpack.c.b16 %v446, %v444
        %v465 = vpack.c.b16 %v447, %v445
        %v466 = vpack.c.b16 %v450, %v448
        %v467 = vpack.c.b16 %v451, %v449
        %484 = vmatprep.subr.bf16.mxu0 %v453
        %485 = vmatpush1.bf16.msra.mxu0 %v452
        %486 = vmatprep.subr.bf16.mxu0 %v455
        %487 = vmatpush1.bf16.msra.mxu0 %v454
        %488 = vmatprep.subr.bf16.mxu0 %v457
        %489 = vmatpush1.bf16.msra.mxu0 %v456
        %490 = vmatprep.subr.bf16.mxu0 %v459
        %491 = vmatpush1.bf16.msra.mxu0 %v458
        %492 = vmatprep.subr.bf16.mxu0 %v461
        %493 = vmatpush1.bf16.msra.mxu0 %v460
        %494 = vmatprep.subr.bf16.mxu0 %v463
        %495 = vmatpush1.bf16.msra.mxu0 %v462
        %496 = vmatprep.subr.bf16.mxu0 %v465
        %497 = vmatpush1.bf16.msra.mxu0 %v464
        %498 = vmatprep.subr.bf16.mxu0 %v467
        %499 = vmatpush1.bf16.msra.mxu0 %v466
        %500 = vmatprep.subr.bf16.mxu0 0
        %501 = vmatpush1.bf16.msra.mxu0 0
        %502 = vmatprep.subr.bf16.mxu0 0
        %503 = vmatpush1.bf16.msra.mxu0 0
        %504 = vmatprep.subr.bf16.mxu0 0
        %505 = vmatpush1.bf16.msra.mxu0 0
        %506 = vmatprep.subr.bf16.mxu0 0
        %507 = vmatpush1.bf16.msra.mxu0 0
        %508 = vmatprep.subr.bf16.mxu0 0
        %509 = vmatpush1.bf16.msra.mxu0 0
        %510 = vmatprep.subr.bf16.mxu0 0
        %511 = vmatpush1.bf16.msra.mxu0 0
        %512 = vmatprep.subr.bf16.mxu0 0
        %513 = vmatpush1.bf16.msra.mxu0 0
        %514 = vmatprep.subr.bf16.mxu0 0
        %515 = vmatpush1.bf16.msra.mxu0 0
        %516 = vmatprep.mubr.bf16.mxu0 0
        %517 = vmatmul.mubr.bf16.gmra.mrb[0].mxu0 %v373
        %v518 = vpop.f32.mrb[0].mxu0
        %v519 = vadd.f32 %v397, %v518
        %v520 = vpop.f32.mrb[0].mxu0
        %v521 = vadd.f32 %v401, %v520
        %v522 = vpop.f32.mrb[0].mxu0
        %v523 = vpop.f32.mrb[0].mxu0
        %524 = vdwg.mxu0
        %v525 = vmax.f32 %v519, 0.0
        %v526 = vmul.f32 %v521, 0.5
        %v527 = vtanh.pop %v526
        %v528 = vadd.f32 %v527, 1.0
        %v529 = vmul.f32 %v528, 0.5
        %v530 = vsub.f32 %v525, %v372
        %v531 = vmul.f32 %v529, %v530
        %v532 = vadd.f32 %v372, %v531
        %v533 = vpack.c.bf16 %v532, %v532
        %s534 = scalar_lea.vmem [#allocation5], 256
        %v535 = vld [vmem:[%s534] sm:$0xff]
        %v536 = vld [vmem:[%s534 + $0x8] sm:$0xff]
        %v537 = vld [vmem:[%s534 + $0x10] sm:$0xff]
        %v538 = vld [vmem:[%s534 + $0x18] sm:$0xff]
        %v539 = vld [vmem:[%s534 + $0x20] sm:$0xff]
        %v540 = vld [vmem:[%s534 + $0x28] sm:$0xff]
        %v541 = vld [vmem:[%s534 + $0x30] sm:$0xff]
        %v542 = vld [vmem:[%s534 + $0x38] sm:$0xff]
        %v543 = vld [vmem:[%s534 + $0x40] sm:$0xff]
        %v544 = vld [vmem:[%s534 + $0x48] sm:$0xff]
        %v545 = vld [vmem:[%s534 + $0x50] sm:$0xff]
        %v546 = vld [vmem:[%s534 + $0x58] sm:$0xff]
        %v547 = vld [vmem:[%s534 + $0x60] sm:$0xff]
        %v548 = vld [vmem:[%s534 + $0x68] sm:$0xff]
        %v549 = vld [vmem:[%s534 + $0x70] sm:$0xff]
        %v550 = vld [vmem:[%s534 + $0x78] sm:$0xff]
        %s551 = scalar_lea.vmem [#allocation7], 2
        %v552 = vld [vmem:[%s551] ss:$4 sm:$0x3]
        %v554 = vlaneseq
        %v555 = vshrl.u32 %v554, 7
        %v556 = vsub.s32 0, %v555
        %v557 = vrot.slane %v552, %v556
        %v558 = vlaneseq
        %v559 = vshrl.u32 %v558, 7
        %v560 = vsub.s32 1, %v559
        %v561 = vrot.slane %v552, %v560
        %v580 = vunpack.c.l.b16 %v535
        %v581 = vunpack.c.h.b16 %v535
        %v582 = vunpack.c.l.b16 %v536
        %v583 = vunpack.c.h.b16 %v536
        %v584 = vunpack.c.l.b16 %v537
        %v585 = vunpack.c.h.b16 %v537
        %v586 = vunpack.c.l.b16 %v538
        %v587 = vunpack.c.h.b16 %v538
        %v588 = vunpack.c.l.b16 %v539
        %v589 = vunpack.c.h.b16 %v539
        %v590 = vunpack.c.l.b16 %v540
        %v591 = vunpack.c.h.b16 %v540
        %v592 = vunpack.c.l.b16 %v541
        %v593 = vunpack.c.h.b16 %v541
        %v594 = vunpack.c.l.b16 %v542
        %v595 = vunpack.c.h.b16 %v542
        %v596 = vunpack.c.l.b16 %v543
        %v597 = vunpack.c.h.b16 %v543
        %v598 = vunpack.c.l.b16 %v544
        %v599 = vunpack.c.h.b16 %v544
        %v600 = vunpack.c.l.b16 %v545
        %v601 = vunpack.c.h.b16 %v545
        %v602 = vunpack.c.l.b16 %v546
        %v603 = vunpack.c.h.b16 %v546
        %v604 = vunpack.c.l.b16 %v547
        %v605 = vunpack.c.h.b16 %v547
        %v606 = vunpack.c.l.b16 %v548
        %v607 = vunpack.c.h.b16 %v548
        %v608 = vunpack.c.l.b16 %v549
        %v609 = vunpack.c.h.b16 %v549
        %v610 = vunpack.c.l.b16 %v550
        %v611 = vunpack.c.h.b16 %v550
        %v612 = vpack.c.b16 %v582, %v580
        %v613 = vpack.c.b16 %v583, %v581
        %v614 = vpack.c.b16 %v586, %v584
        %v615 = vpack.c.b16 %v587, %v585
        %v616 = vpack.c.b16 %v590, %v588
        %v617 = vpack.c.b16 %v591, %v589
        %v618 = vpack.c.b16 %v594, %v592
        %v619 = vpack.c.b16 %v595, %v593
        %v620 = vpack.c.b16 %v598, %v596
        %v621 = vpack.c.b16 %v599, %v597
        %v622 = vpack.c.b16 %v602, %v600
        %v623 = vpack.c.b16 %v603, %v601
        %v624 = vpack.c.b16 %v606, %v604
        %v625 = vpack.c.b16 %v607, %v605
        %v626 = vpack.c.b16 %v610, %v608
        %v627 = vpack.c.b16 %v611, %v609
        %644 = vmatprep.subr.bf16.mxu0 %v613
        %645 = vmatpush1.bf16.msra.mxu0 %v612
        %646 = vmatprep.subr.bf16.mxu0 %v615
        %647 = vmatpush1.bf16.msra.mxu0 %v614
        %648 = vmatprep.subr.bf16.mxu0 %v617
        %649 = vmatpush1.bf16.msra.mxu0 %v616
        %650 = vmatprep.subr.bf16.mxu0 %v619
        %651 = vmatpush1.bf16.msra.mxu0 %v618
        %652 = vmatprep.subr.bf16.mxu0 %v621
        %653 = vmatpush1.bf16.msra.mxu0 %v620
        %654 = vmatprep.subr.bf16.mxu0 %v623
        %655 = vmatpush1.bf16.msra.mxu0 %v622
        %656 = vmatprep.subr.bf16.mxu0 %v625
        %657 = vmatpush1.bf16.msra.mxu0 %v624
        %658 = vmatprep.subr.bf16.mxu0 %v627
        %659 = vmatpush1.bf16.msra.mxu0 %v626
        %660 = vmatprep.subr.bf16.mxu0 0
        %661 = vmatpush1.bf16.msra.mxu0 0
        %662 = vmatprep.subr.bf16.mxu0 0
        %663 = vmatpush1.bf16.msra.mxu0 0
        %664 = vmatprep.subr.bf16.mxu0 0
        %665 = vmatpush1.bf16.msra.mxu0 0
        %666 = vmatprep.subr.bf16.mxu0 0
        %667 = vmatpush1.bf16.msra.mxu0 0
        %668 = vmatprep.subr.bf16.mxu0 0
        %669 = vmatpush1.bf16.msra.mxu0 0
        %670 = vmatprep.subr.bf16.mxu0 0
        %671 = vmatpush1.bf16.msra.mxu0 0
        %672 = vmatprep.subr.bf16.mxu0 0
        %673 = vmatpush1.bf16.msra.mxu0 0
        %674 = vmatprep.subr.bf16.mxu0 0
        %675 = vmatpush1.bf16.msra.mxu0 0
        %676 = vmatprep.mubr.bf16.mxu0 0
        %677 = vmatmul.mubr.bf16.gmra.mrb[0].mxu0 %v533
        %v678 = vpop.f32.mrb[0].mxu0
        %v679 = vadd.f32 %v557, %v678
        %v680 = vpop.f32.mrb[0].mxu0
        %v681 = vadd.f32 %v561, %v680
        %v682 = vpop.f32.mrb[0].mxu0
        %v683 = vpop.f32.mrb[0].mxu0
        %684 = vdwg.mxu0
        %v685 = vmax.f32 %v679, 0.0
        %v686 = vmul.f32 %v681, 0.5
        %v687 = vtanh.pop %v686
        %v688 = vadd.f32 %v687, 1.0
        %v689 = vmul.f32 %v688, 0.5
        %v690 = vsub.f32 %v685, %v532
        %v691 = vmul.f32 %v689, %v690
        %v692 = vadd.f32 %v532, %v691
        %v693 = vpack.c.bf16 %v692, %v692
        %s694 = scalar_lea.vmem [#allocation5], 384
        %v695 = vld [vmem:[%s694] sm:$0xff]
        %v696 = vld [vmem:[%s694 + $0x8] sm:$0xff]
        %v697 = vld [vmem:[%s694 + $0x10] sm:$0xff]
        %v698 = vld [vmem:[%s694 + $0x18] sm:$0xff]
        %v699 = vld [vmem:[%s694 + $0x20] sm:$0xff]
        %v700 = vld [vmem:[%s694 + $0x28] sm:$0xff]
        %v701 = vld [vmem:[%s694 + $0x30] sm:$0xff]
        %v702 = vld [vmem:[%s694 + $0x38] sm:$0xff]
        %v703 = vld [vmem:[%s694 + $0x40] sm:$0xff]
        %v704 = vld [vmem:[%s694 + $0x48] sm:$0xff]
        %v705 = vld [vmem:[%s694 + $0x50] sm:$0xff]
        %v706 = vld [vmem:[%s694 + $0x58] sm:$0xff]
        %v707 = vld [vmem:[%s694 + $0x60] sm:$0xff]
        %v708 = vld [vmem:[%s694 + $0x68] sm:$0xff]
        %v709 = vld [vmem:[%s694 + $0x70] sm:$0xff]
        %v710 = vld [vmem:[%s694 + $0x78] sm:$0xff]
        %s711 = scalar_lea.vmem [#allocation7], 3
        %v712 = vld [vmem:[%s711] ss:$4 sm:$0x3]
        %v714 = vlaneseq
        %v715 = vshrl.u32 %v714, 7
        %v716 = vsub.s32 0, %v715
        %v717 = vrot.slane %v712, %v716
        %v718 = vlaneseq
        %v719 = vshrl.u32 %v718, 7
        %v720 = vsub.s32 1, %v719
        %v721 = vrot.slane %v712, %v720
        %v740 = vunpack.c.l.b16 %v695
        %v741 = vunpack.c.h.b16 %v695
        %v742 = vunpack.c.l.b16 %v696
        %v743 = vunpack.c.h.b16 %v696
        %v744 = vunpack.c.l.b16 %v697
        %v745 = vunpack.c.h.b16 %v697
        %v746 = vunpack.c.l.b16 %v698
        %v747 = vunpack.c.h.b16 %v698
        %v748 = vunpack.c.l.b16 %v699
        %v749 = vunpack.c.h.b16 %v699
        %v750 = vunpack.c.l.b16 %v700
        %v751 = vunpack.c.h.b16 %v700
        %v752 = vunpack.c.l.b16 %v701
        %v753 = vunpack.c.h.b16 %v701
        %v754 = vunpack.c.l.b16 %v702
        %v755 = vunpack.c.h.b16 %v702
        %v756 = vunpack.c.l.b16 %v703
        %v757 = vunpack.c.h.b16 %v703
        %v758 = vunpack.c.l.b16 %v704
        %v759 = vunpack.c.h.b16 %v704
        %v760 = vunpack.c.l.b16 %v705
        %v761 = vunpack.c.h.b16 %v705
        %v762 = vunpack.c.l.b16 %v706
        %v763 = vunpack.c.h.b16 %v706
        %v764 = vunpack.c.l.b16 %v707
        %v765 = vunpack.c.h.b16 %v707
        %v766 = vunpack.c.l.b16 %v708
        %v767 = vunpack.c.h.b16 %v708
        %v768 = vunpack.c.l.b16 %v709
        %v769 = vunpack.c.h.b16 %v709
        %v770 = vunpack.c.l.b16 %v710
        %v771 = vunpack.c.h.b16 %v710
        %v772 = vpack.c.b16 %v742, %v740
        %v773 = vpack.c.b16 %v743, %v741
        %v774 = vpack.c.b16 %v746, %v744
        %v775 = vpack.c.b16 %v747, %v745
        %v776 = vpack.c.b16 %v750, %v748
        %v777 = vpack.c.b16 %v751, %v749
        %v778 = vpack.c.b16 %v754, %v752
        %v779 = vpack.c.b16 %v755, %v753
        %v780 = vpack.c.b16 %v758, %v756
        %v781 = vpack.c.b16 %v759, %v757
        %v782 = vpack.c.b16 %v762, %v760
        %v783 = vpack.c.b16 %v763, %v761
        %v784 = vpack.c.b16 %v766, %v764
        %v785 = vpack.c.b16 %v767, %v765
        %v786 = vpack.c.b16 %v770, %v768
        %v787 = vpack.c.b16 %v771, %v769
        %804 = vmatprep.subr.bf16.mxu0 %v773
        %805 = vmatpush1.bf16.msra.mxu0 %v772
        %806 = vmatprep.subr.bf16.mxu0 %v775
        %807 = vmatpush1.bf16.msra.mxu0 %v774
        %808 = vmatprep.subr.bf16.mxu0 %v777
        %809 = vmatpush1.bf16.msra.mxu0 %v776
        %810 = vmatprep.subr.bf16.mxu0 %v779
        %811 = vmatpush1.bf16.msra.mxu0 %v778
        %812 = vmatprep.subr.bf16.mxu0 %v781
        %813 = vmatpush1.bf16.msra.mxu0 %v780
        %814 = vmatprep.subr.bf16.mxu0 %v783
        %815 = vmatpush1.bf16.msra.mxu0 %v782
        %816 = vmatprep.subr.bf16.mxu0 %v785
        %817 = vmatpush1.bf16.msra.mxu0 %v784
        %818 = vmatprep.subr.bf16.mxu0 %v787
        %819 = vmatpush1.bf16.msra.mxu0 %v786
        %820 = vmatprep.subr.bf16.mxu0 0
        %821 = vmatpush1.bf16.msra.mxu0 0
        %822 = vmatprep.subr.bf16.mxu0 0
        %823 = vmatpush1.bf16.msra.mxu0 0
        %824 = vmatprep.subr.bf16.mxu0 0
        %825 = vmatpush1.bf16.msra.mxu0 0
        %826 = vmatprep.subr.bf16.mxu0 0
        %827 = vmatpush1.bf16.msra.mxu0 0
        %828 = vmatprep.subr.bf16.mxu0 0
        %829 = vmatpush1.bf16.msra.mxu0 0
        %830 = vmatprep.subr.bf16.mxu0 0
        %831 = vmatpush1.bf16.msra.mxu0 0
        %832 = vmatprep.subr.bf16.mxu0 0
        %833 = vmatpush1.bf16.msra.mxu0 0
        %834 = vmatprep.subr.bf16.mxu0 0
        %835 = vmatpush1.bf16.msra.mxu0 0
        %836 = vmatprep.mubr.bf16.mxu0 0
        %837 = vmatmul.mubr.bf16.gmra.mrb[0].mxu0 %v693
        %v838 = vpop.f32.mrb[0].mxu0
        %v839 = vadd.f32 %v717, %v838
        %v840 = vpop.f32.mrb[0].mxu0
        %v841 = vadd.f32 %v721, %v840
        %v842 = vpop.f32.mrb[0].mxu0
        %v843 = vpop.f32.mrb[0].mxu0
        %844 = vdwg.mxu0
        %v845 = vmax.f32 %v839, 0.0
        %v846 = vmul.f32 %v841, 0.5
        %v847 = vtanh.pop %v846
        %v848 = vadd.f32 %v847, 1.0
        %v849 = vmul.f32 %v848, 0.5
        %v850 = vsub.f32 %v845, %v692
        %v851 = vmul.f32 %v849, %v850
        %v852 = vadd.f32 %v692, %v851
        %853 = vst [vmem:[%s212] sm:$0xff] %v852
        %s854 = sand.u32 %s97, 1
        %s855 = scalar_lea.sflag [#allocation4], %s854
        %s856 = sand.u32 %s97, 1
        %s857 = smul.addr %s856, 8
        %s858 = scalar_lea.vmem [#allocation8], %s857
        // Predicated region
        $region45: #{tpu_custom_call.1} parent=31 // pred_check
          %p859 = pneg %p107
        $region46: #{tpu_custom_call.1} parent=31 // pred_check_branch
          %861 = sbr.rel (%p859) target = $region48
        $region47: #{tpu_custom_call.1} parent=31 // pred_region
          %s863 = ssub.s32 128, 128
          %864 = vsyncadd %s855, %s863
          %s865 = smul.addr %s21, 128
          %s866 = scalar_lea.hbm %s3, %s865
          %s868 = sshll.u32 %s858, 4
          %s869 = int_to_ptr.vmem [resolvable:$true] %s868
          %871 = dma.vmem_to_hbm [thread:$0]  %s869, 128, %s866, %s855
        $region48: #{tpu_custom_call.1} parent=31 // pred_fallthru
          _
      $region32: #{tpu_custom_call.1} parent=5 // pred_fallthru
        _
      %p872 = scmp.le.s32.totalorder 2, %s16
      // Predicated region
      $region49: #{tpu_custom_call.1} parent=5 // pred_check
        %p873 = pneg %p872
      $region50: #{tpu_custom_call.1} parent=5 // pred_check_branch
        %875 = sbr.rel (%p873) target = $region52
      $region51: #{tpu_custom_call.1} parent=5 // pred_region
        %s876 = ssub.s32 %s16, 2
        // Predicated region
        $region53: #{tpu_custom_call.1} parent=51 // pred_check
          %p877 = pneg %p113
        $region54: #{tpu_custom_call.1} parent=51 // pred_check_branch
          %879 = sbr.rel (%p877) target = $region56
        $region55: #{tpu_custom_call.1} parent=51 // pred_region
          %s880 = sand.u32 %s98, 1
          %s881 = scalar_lea.sflag [#allocation4], %s880
          %s882 = sand.u32 %s98, 1
          %s883 = smul.addr %s882, 8
          %s884 = scalar_lea.vmem [#allocation8], %s883
          %885 = dma.done %s881, 128
        $region56: #{tpu_custom_call.1} parent=51 // pred_fallthru
          _
      $region52: #{tpu_custom_call.1} parent=5 // pred_fallthru
        _
    $region6: #{tpu_custom_call.1} parent=1 // loop_footer
      %s20 = sadd.s32 1, %s16
    $region7: #{tpu_custom_call.1} parent=1 // loop_footer_branch
      %15 = sbr.rel target = $region3
    $region8: #{tpu_custom_call.1} parent=1 // loop_exit
      _
    %886 = vsyncpa [#allocation3], 1
    %s887 = scalar_lea.sflag [#allocation3], 1
    %888 = vsyncpa %s887, 1
    %889 = vsyncpa [#allocation6], 1
    %890 = vsyncpa [#allocation4], 1
    %s891 = scalar_lea.sflag [#allocation4], 1
    %892 = vsyncpa %s891, 1

// kernel: tpu_custom_call.1
$region0: #{tpu_custom_call.1}
  #allocation0 [shape = 'u32[]', space=smem, size = 0x4, offset = 0x4, fixed_abs, tag = 'smem constant byte address 0x4 - core index']
  #allocation1 [shape = 'u32[144,128]{1,0:T(1,128)}', space=vmem, size = 0x12000, scoped, tag = 'internal scratch']
  %s0 = inlined_call_operand.hbm [shape: f32[16,128], index: 0, kind: input, shape index: {}]
  %s1 = inlined_call_operand.hbm [shape: bf16[4,128,256], index: 1, kind: input, shape index: {}]
  %s2 = inlined_call_operand.hbm [shape: f32[4,256], index: 2, kind: input, shape index: {}]
  %s3 = inlined_call_operand.hbm [shape: f32[16,128], index: 3, kind: output, shape index: {}]
  %s4 = sld [smem:[#allocation0]]
  $region57: #{tpu_custom_call.1} parent=0
    _
  %s6 = ssub.s32 1, %s4
  %s7 = scalar_select 0, %s6, %s4
  $region1: #{tpu_custom_call.1} parent=0
    #allocation2 [shape = 'u8[8192]{0}', space=vmem, size = 0x2000, scoped, tag = 'input window, operand 0']
    #allocation3 [shape = 's32[2]{0}', space=sflag, size = 0x8, scoped, tag = 'scoped memory for tpu_custom_call.1']
    #allocation4 [shape = 's32[2]{0}', space=sflag, size = 0x8, scoped, tag = 'scoped memory for tpu_custom_call.1']
    #allocation5 [shape = 'u8[262144]{0}', space=vmem, size = 0x40000, scoped, tag = 'input window, operand 1, single buffered']
    #allocation6 [shape = 's32[1]{0}', space=sflag, size = 0x4, scoped, tag = 'scoped memory for tpu_custom_call.1']
    #allocation7 [shape = 'u8[4096]{0}', space=vmem, size = 0x1000, scoped, tag = 'input window, operand 2, single buffered']
    #allocation8 [shape = 'u8[8192]{0}', space=vmem, size = 0x2000, scoped, tag = 'output window, operand 0']
    %8 = vsyncpa [#allocation3], 0
    %s9 = scalar_lea.sflag [#allocation3], 1
    %10 = vsyncpa %s9, 0
    %11 = vsyncpa [#allocation6], 0
    %12 = vsyncpa [#allocation4], 0
    %s13 = scalar_lea.sflag [#allocation4], 1
    %14 = vsyncpa %s13, 0
    loop: start=0, step=1, limit=4
    $region2: #{tpu_custom_call.1} parent=1 // loop_pre_header
      _
    $region3: #{tpu_custom_call.1} parent=1 // loop_header
      %s16 = sphi 0, %s20
      %p17 = scmp.ge.s32.totalorder %s16, 4
      %s26 = sphi 0, %s28
      %s29 = sphi 0, %s26
      %s30 = sphi 0, %s29
      %s46 = sphi 0, %s30
      %s50 = sphi 0, %s50
      %s52 = sphi 0, %s50
      %s53 = sphi 0, %s52
      %s67 = sphi 0, %s53
      %s71 = sphi 0, %s71
      %s73 = sphi 0, %s71
      %s74 = sphi 0, %s73
      %s88 = sphi 0, %s74
      %s94 = sphi 0, %s96
      %s97 = sphi 0, %s94
      %s98 = sphi 0, %s97
      %s114 = sphi 0, %s98
    $region4: #{tpu_custom_call.1} parent=1 // loop_header_branch
      %19 = sbr.rel (%p17) target = $region8
    $region5: #{tpu_custom_call.1} parent=1 // loop_body
      %s21 = ssub.s32 %s16, 1
      %s22 = ssub.s32 %s16, 2
      %s23 = sadd.s32 %s16, 1
      %s24 = ssub.s32 %s16, %s23
      %p25 = scmp.eq.s32.totalorder %s24, 0
      %s27 = sadd.s32 %s26, 1
      %s28 = scalar_select %p25, %s26, %s27
      %p31 = pneg %p25
      %p32 = scmp.eq.s32.totalorder %s16, 1
      %p33 = por %p31, %p32
      %p34 = scmp.ne.s32.totalorder %s26, %s29
      %p35 = scmp.eq.s32.totalorder %s16, 0
      %p36 = por %p34, %p35
      %p37 = scmp.ne.s32.totalorder %s26, %s29
      %p38 = scmp.eq.s32.totalorder %s21, 1
      %p39 = por %p37, %p38
      %p40 = scmp.ne.s32.totalorder %s29, %s30
      %p41 = scmp.eq.s32.totalorder %s21, 0
      %p42 = por %p40, %p41
      %p43 = scmp.ne.s32.totalorder %s29, %s30
      %p44 = scmp.eq.s32.totalorder %s22, 1
      %p45 = por %p43, %p44
      %p47 = scmp.ne.s32.totalorder %s30, %s46
      %p48 = scmp.eq.s32.totalorder %s22, 0
      %p49 = por %p47, %p48
      %s51 = sadd.s32 %s50, 1
      %p54 = scmp.eq.s32.totalorder %s16, 1
      %p55 = scmp.ne.s32.totalorder %s50, %s52
      %p56 = scmp.eq.s32.totalorder %s16, 0
      %p57 = por %p55, %p56
      %p58 = scmp.ne.s32.totalorder %s50, %s52
      %p59 = scmp.eq.s32.totalorder %s21, 1
      %p60 = por %p58, %p59
      %p61 = scmp.ne.s32.totalorder %s52, %s53
      %p62 = scmp.eq.s32.totalorder %s21, 0
      %p63 = por %p61, %p62
      %p64 = scmp.ne.s32.totalorder %s52, %s53
      %p65 = scmp.eq.s32.totalorder %s22, 1
      %p66 = por %p64, %p65
      %p68 = scmp.ne.s32.totalorder %s53, %s67
      %p69 = scmp.eq.s32.totalorder %s22, 0
      %p70 = por %p68, %p69
      %s72 = sadd.s32 %s71, 1
      %p75 = scmp.eq.s32.totalorder %s16, 1
      %p76 = scmp.ne.s32.totalorder %s71, %s73
      %p77 = scmp.eq.s32.totalorder %s16, 0
      %p78 = por %p76, %p77
      %p79 = scmp.ne.s32.totalorder %s71, %s73
      %p80 = scmp.eq.s32.totalorder %s21, 1
      %p81 = por %p79, %p80
      %p82 = scmp.ne.s32.totalorder %s73, %s74
      %p83 = scmp.eq.s32.totalorder %s21, 0
      %p84 = por %p82, %p83
      %p85 = scmp.ne.s32.totalorder %s73, %s74
      %p86 = scmp.eq.s32.totalorder %s22, 1
      %p87 = por %p85, %p86
      %p89 = scmp.ne.s32.totalorder %s74, %s88
      %p90 = scmp.eq.s32.totalorder %s22, 0
      %p91 = por %p89, %p90
      %s92 = ssub.s32 %s16, %s23
      %p93 = scmp.eq.s32.totalorder %s92, 0
      %s95 = sadd.s32 %s94, 1
      %s96 = scalar_select %p93, %s94, %s95
      %p99 = pneg %p93
      %p100 = scmp.eq.s32.totalorder %s16, 1
      %p101 = por %p99, %p100
      %p102 = scmp.ne.s32.totalorder %s94, %s97
      %p103 = scmp.eq.s32.totalorder %s16, 0
      %p104 = por %p102, %p103
      %p105 = scmp.ne.s32.totalorder %s94, %s97
      %p106 = scmp.eq.s32.totalorder %s21, 1
      %p107 = por %p105, %p106
      %p108 = scmp.ne.s32.totalorder %s97, %s98
      %p109 = scmp.eq.s32.totalorder %s21, 0
      %p110 = por %p108, %p109
      %p111 = scmp.ne.s32.totalorder %s97, %s98
      %p112 = scmp.eq.s32.totalorder %s22, 1
      %p113 = por %p111, %p112
      %p115 = scmp.ne.s32.totalorder %s98, %s114
      %p116 = scmp.eq.s32.totalorder %s22, 0
      %p117 = por %p115, %p116
      %p118 = scmp.le.s32.totalorder 1, %s16
      %p119 = scmp.lt.s32.totalorder %s16, 3
      %p120 = pnand %p118, %p119
      %p121 = pneg %p120
      // Predicated region
      $region9: #{tpu_custom_call.1} parent=5 // pred_check
        _
      $region10: #{tpu_custom_call.1} parent=5 // pred_check_branch
        %123 = sbr.rel (%p120) target = $region12
      $region11: #{tpu_custom_call.1} parent=5 // pred_region
        %s124 = ssub.s32 %s16, 1
        // Predicated region
        $region13: #{tpu_custom_call.1} parent=11 // pred_check
          %p125 = pneg %p63
        $region14: #{tpu_custom_call.1} parent=11 // pred_check_branch
          %127 = sbr.rel (%p125) target = $region16
        $region15: #{tpu_custom_call.1} parent=11 // pred_region
          %s129 = ssub.s32 8192, 8192
          %130 = vsyncadd [#allocation6], %s129
          %s131 = sshll.u32 [#allocation5], 4
          %s132 = int_to_ptr.vmem [resolvable:$true] %s131
          %137 = dma.hbm_to_vmem [thread:$0]  %s1, 8192, %s132, [#allocation6], 128, 128, 8
        $region16: #{tpu_custom_call.1} parent=11 // pred_fallthru
          _
        // Predicated region
        $region17: #{tpu_custom_call.1} parent=11 // pred_check
          %p138 = pneg %p84
        $region18: #{tpu_custom_call.1} parent=11 // pred_check_branch
          %140 = sbr.rel (%p138) target = $region20
        $region19: #{tpu_custom_call.1} parent=11 // pred_region
          %s142 = ssub.s32 128, 128
          %143 = vsyncadd [#allocation6], %s142
          %s145 = sshll.u32 [#allocation7], 4
          %s146 = int_to_ptr.vmem [resolvable:$true] %s145
          %148 = dma.hbm_to_vmem [thread:$0]  %s2, 128, %s146, [#allocation6]
        $region20: #{tpu_custom_call.1} parent=11 // pred_fallthru
          _
      $region12: #{tpu_custom_call.1} parent=5 // pred_fallthru
        _
      %p149 = scmp.lt.s32.totalorder %s16, 2
      // Predicated region
      $region21: #{tpu_custom_call.1} parent=5 // pred_check
        %p150 = pneg %p149
      $region22: #{tpu_custom_call.1} parent=5 // pred_check_branch
        %152 = sbr.rel (%p150) target = $region24
      $region23: #{tpu_custom_call.1} parent=5 // pred_region
        // Predicated region
        $region25: #{tpu_custom_call.1} parent=23 // pred_check
          %p153 = pneg %p36
        $region26: #{tpu_custom_call.1} parent=23 // pred_check_branch
          %155 = sbr.rel (%p153) target = $region28
        $region27: #{tpu_custom_call.1} parent=23 // pred_region
          %s156 = sand.u32 %s26, 1
          %s157 = scalar_lea.sflag [#allocation3], %s156
          %s158 = sand.u32 %s26, 1
          %s159 = smul.addr %s158, 8
          %s160 = scalar_lea.vmem [#allocation2], %s159
          %s162 = ssub.s32 128, 128
          %163 = vsyncadd %s157, %s162
          %s164 = smul.addr %s16, 128
          %s165 = scalar_lea.hbm %s0, %s164
          %s167 = sshll.u32 %s160, 4
          %s168 = int_to_ptr.vmem [resolvable:$true] %s167
          %170 = dma.hbm_to_vmem [thread:$0]  %s165, 128, %s168, %s157
        $region28: #{tpu_custom_call.1} parent=23 // pred_fallthru
          _
      $region24: #{tpu_custom_call.1} parent=5 // pred_fallthru
        _
      %p171 = scmp.le.s32.totalorder 1, %s16
      %p172 = scmp.lt.s32.totalorder %s16, 3
      %p173 = pnand %p171, %p172
      %p174 = pneg %p173
      // Predicated region
      $region29: #{tpu_custom_call.1} parent=5 // pred_check
        _
      $region30: #{tpu_custom_call.1} parent=5 // pred_check_branch
        %176 = sbr.rel (%p173) target = $region32
      $region31: #{tpu_custom_call.1} parent=5 // pred_region
        %s177 = ssub.s32 %s16, 1
        %s178 = sand.u32 %s29, 1
        %s179 = scalar_lea.sflag [#allocation3], %s178
        %s180 = sand.u32 %s29, 1
        %s181 = smul.addr %s180, 8
        %s182 = scalar_lea.vmem [#allocation2], %s181
        // Predicated region
        $region33: #{tpu_custom_call.1} parent=31 // pred_check
          %p183 = pneg %p42
        $region34: #{tpu_custom_call.1} parent=31 // pred_check_branch
          %185 = sbr.rel (%p183) target = $region36
        $region35: #{tpu_custom_call.1} parent=31 // pred_region
          %186 = dma.done %s179, 128
        $region36: #{tpu_custom_call.1} parent=31 // pred_fallthru
          _
        // Predicated region
        $region37: #{tpu_custom_call.1} parent=31 // pred_check
          %p187 = pneg %p63
        $region38: #{tpu_custom_call.1} parent=31 // pred_check_branch
          %189 = sbr.rel (%p187) target = $region40
        $region39: #{tpu_custom_call.1} parent=31 // pred_region
          %190 = dma.done [#allocation6], 8192
        $region40: #{tpu_custom_call.1} parent=31 // pred_fallthru
          _
        // Predicated region
        $region41: #{tpu_custom_call.1} parent=31 // pred_check
          %p191 = pneg %p84
        $region42: #{tpu_custom_call.1} parent=31 // pred_check_branch
          %193 = sbr.rel (%p191) target = $region44
        $region43: #{tpu_custom_call.1} parent=31 // pred_region
          %194 = dma.done [#allocation6], 128
        $region44: #{tpu_custom_call.1} parent=31 // pred_fallthru
          _
        %s195 = sand.u32 %s29, 1
        %s196 = scalar_lea.sflag [#allocation3], %s195
        %s197 = sand.u32 %s29, 1
        %s198 = smul.addr %s197, 8
        %s199 = scalar_lea.vmem [#allocation2], %s198
        %p200 = pneg %p42
        %p201 = pneg %p39
        %p202 = pneg %p63
        %p203 = pneg %p60
        %p204 = pneg %p84
        %p205 = pneg %p81
        %p206 = pneg %p110
        %p207 = pneg %p107
        %s208 = sand.u32 %s97, 1
        %s209 = scalar_lea.sflag [#allocation4], %s208
        %s210 = sand.u32 %s97, 1
        %s211 = smul.addr %s210, 8
        %s212 = scalar_lea.vmem [#allocation8], %s211
        %v214 = vld [vmem:[%s182] sm:$0xff]
        %v215 = vpack.c.bf16 %v214, %v214
        %v216 = vld [vmem:[#allocation5] sm:$0xff]
        %v217 = vld [vmem:[#allocation5 + $0x8] sm:$0xff]
        %v218 = vld [vmem:[#allocation5 + $0x10] sm:$0xff]
        %v219 = vld [vmem:[#allocation5 + $0x18] sm:$0xff]
        %v220 = vld [vmem:[#allocation5 + $0x20] sm:$0xff]
        %v221 = vld [vmem:[#allocation5 + $0x28] sm:$0xff]
        %v222 = vld [vmem:[#allocation5 + $0x30] sm:$0xff]
        %v223 = vld [vmem:[#allocation5 + $0x38] sm:$0xff]
        %v224 = vld [vmem:[#allocation5 + $0x40] sm:$0xff]
        %v225 = vld [vmem:[#allocation5 + $0x48] sm:$0xff]
        %v226 = vld [vmem:[#allocation5 + $0x50] sm:$0xff]
        %v227 = vld [vmem:[#allocation5 + $0x58] sm:$0xff]
        %v228 = vld [vmem:[#allocation5 + $0x60] sm:$0xff]
        %v229 = vld [vmem:[#allocation5 + $0x68] sm:$0xff]
        %v230 = vld [vmem:[#allocation5 + $0x70] sm:$0xff]
        %v231 = vld [vmem:[#allocation5 + $0x78] sm:$0xff]
        %v232 = vld [vmem:[#allocation7] ss:$4 sm:$0x3]
        %v234 = vlaneseq
        %v235 = vshrl.u32 %v234, 7
        %v236 = vsub.s32 0, %v235
        %v237 = vrot.slane %v232, %v236
        %v238 = vlaneseq
        %v239 = vshrl.u32 %v238, 7
        %v240 = vsub.s32 1, %v239
        %v241 = vrot.slane %v232, %v240
        %v260 = vunpack.c.l.b16 %v216
        %v261 = vunpack.c.h.b16 %v216
        %v262 = vunpack.c.l.b16 %v217
        %v263 = vunpack.c.h.b16 %v217
        %v264 = vunpack.c.l.b16 %v218
        %v265 = vunpack.c.h.b16 %v218
        %v266 = vunpack.c.l.b16 %v219
        %v267 = vunpack.c.h.b16 %v219
        %v268 = vunpack.c.l.b16 %v220
        %v269 = vunpack.c.h.b16 %v220
        %v270 = vunpack.c.l.b16 %v221
        %v271 = vunpack.c.h.b16 %v221
        %v272 = vunpack.c.l.b16 %v222
        %v273 = vunpack.c.h.b16 %v222
        %v274 = vunpack.c.l.b16 %v223
        %v275 = vunpack.c.h.b16 %v223
        %v276 = vunpack.c.l.b16 %v224
        %v277 = vunpack.c.h.b16 %v224
        %v278 = vunpack.c.l.b16 %v225
        %v279 = vunpack.c.h.b16 %v225
        %v280 = vunpack.c.l.b16 %v226
        %v281 = vunpack.c.h.b16 %v226
        %v282 = vunpack.c.l.b16 %v227
        %v283 = vunpack.c.h.b16 %v227
        %v284 = vunpack.c.l.b16 %v228
        %v285 = vunpack.c.h.b16 %v228
        %v286 = vunpack.c.l.b16 %v229
        %v287 = vunpack.c.h.b16 %v229
        %v288 = vunpack.c.l.b16 %v230
        %v289 = vunpack.c.h.b16 %v230
        %v290 = vunpack.c.l.b16 %v231
        %v291 = vunpack.c.h.b16 %v231
        %v292 = vpack.c.b16 %v262, %v260
        %v293 = vpack.c.b16 %v263, %v261
        %v294 = vpack.c.b16 %v266, %v264
        %v295 = vpack.c.b16 %v267, %v265
        %v296 = vpack.c.b16 %v270, %v268
        %v297 = vpack.c.b16 %v271, %v269
        %v298 = vpack.c.b16 %v274, %v272
        %v299 = vpack.c.b16 %v275, %v273
        %v300 = vpack.c.b16 %v278, %v276
        %v301 = vpack.c.b16 %v279, %v277
        %v302 = vpack.c.b16 %v282, %v280
        %v303 = vpack.c.b16 %v283, %v281
        %v304 = vpack.c.b16 %v286, %v284
        %v305 = vpack.c.b16 %v287, %v285
        %v306 = vpack.c.b16 %v290, %v288
        %v307 = vpack.c.b16 %v291, %v289
        %324 = vmatprep.subr.bf16.mxu0 %v293
        %325 = vmatpush1.bf16.msra.mxu0 %v292
        %326 = vmatprep.subr.bf16.mxu0 %v295
        %327 = vmatpush1.bf16.msra.mxu0 %v294
        %328 = vmatprep.subr.bf16.mxu0 %v297
        %329 = vmatpush1.bf16.msra.mxu0 %v296
        %330 = vmatprep.subr.bf16.mxu0 %v299
        %331 = vmatpush1.bf16.msra.mxu0 %v298
        %332 = vmatprep.subr.bf16.mxu0 %v301
        %333 = vmatpush1.bf16.msra.mxu0 %v300
        %334 = vmatprep.subr.bf16.mxu0 %v303
        %335 = vmatpush1.bf16.msra.mxu0 %v302
        %336 = vmatprep.subr.bf16.mxu0 %v305
        %337 = vmatpush1.bf16.msra.mxu0 %v304
        %338 = vmatprep.subr.bf16.mxu0 %v307
        %339 = vmatpush1.bf16.msra.mxu0 %v306
        %340 = vmatprep.subr.bf16.mxu0 0
        %341 = vmatpush1.bf16.msra.mxu0 0
        %342 = vmatprep.subr.bf16.mxu0 0
        %343 = vmatpush1.bf16.msra.mxu0 0
        %344 = vmatprep.subr.bf16.mxu0 0
        %345 = vmatpush1.bf16.msra.mxu0 0
        %346 = vmatprep.subr.bf16.mxu0 0
        %347 = vmatpush1.bf16.msra.mxu0 0
        %348 = vmatprep.subr.bf16.mxu0 0
        %349 = vmatpush1.bf16.msra.mxu0 0
        %350 = vmatprep.subr.bf16.mxu0 0
        %351 = vmatpush1.bf16.msra.mxu0 0
        %352 = vmatprep.subr.bf16.mxu0 0
        %353 = vmatpush1.bf16.msra.mxu0 0
        %354 = vmatprep.subr.bf16.mxu0 0
        %355 = vmatpush1.bf16.msra.mxu0 0
        %356 = vmatprep.mubr.bf16.mxu0 0
        %357 = vmatmul.mubr.bf16.gmra.mrb[0].mxu0 %v215
        %v358 = vpop.f32.mrb[0].mxu0
        %v359 = vadd.f32 %v237, %v358
        %v360 = vpop.f32.mrb[0].mxu0
        %v361 = vadd.f32 %v241, %v360
        %v362 = vpop.f32.mrb[0].mxu0
        %v363 = vpop.f32.mrb[0].mxu0
        %364 = vdwg.mxu0
        %v365 = vmax.f32 %v359, 0.0
        %v366 = vmul.f32 %v361, 0.5
        %v367 = vtanh.pop %v366
        %v368 = vadd.f32 %v367, 1.0
        %v369 = vmul.f32 %v368, 0.5
        %v370 = vsub.f32 %v365, %v214
        %v371 = vmul.f32 %v369, %v370
        %v372 = vadd.f32 %v214, %v371
        %v373 = vpack.c.bf16 %v372, %v372
        %s374 = scalar_lea.vmem [#allocation5], 128
        %v375 = vld [vmem:[%s374] sm:$0xff]
        %v376 = vld [vmem:[%s374 + $0x8] sm:$0xff]
        %v377 = vld [vmem:[%s374 + $0x10] sm:$0xff]
        %v378 = vld [vmem:[%s374 + $0x18] sm:$0xff]
        %v379 = vld [vmem:[%s374 + $0x20] sm:$0xff]
        %v380 = vld [vmem:[%s374 + $0x28] sm:$0xff]
        %v381 = vld [vmem:[%s374 + $0x30] sm:$0xff]
        %v382 = vld [vmem:[%s374 + $0x38] sm:$0xff]
        %v383 = vld [vmem:[%s374 + $0x40] sm:$0xff]
        %v384 = vld [vmem:[%s374 + $0x48] sm:$0xff]
        %v385 = vld [vmem:[%s374 + $0x50] sm:$0xff]
        %v386 = vld [vmem:[%s374 + $0x58] sm:$0xff]
        %v387 = vld [vmem:[%s374 + $0x60] sm:$0xff]
        %v388 = vld [vmem:[%s374 + $0x68] sm:$0xff]
        %v389 = vld [vmem:[%s374 + $0x70] sm:$0xff]
        %v390 = vld [vmem:[%s374 + $0x78] sm:$0xff]
        %s391 = scalar_lea.vmem [#allocation7], 1
        %v392 = vld [vmem:[%s391] ss:$4 sm:$0x3]
        %v394 = vlaneseq
        %v395 = vshrl.u32 %v394, 7
        %v396 = vsub.s32 0, %v395
        %v397 = vrot.slane %v392, %v396
        %v398 = vlaneseq
        %v399 = vshrl.u32 %v398, 7
        %v400 = vsub.s32 1, %v399
        %v401 = vrot.slane %v392, %v400
        %v420 = vunpack.c.l.b16 %v375
        %v421 = vunpack.c.h.b16 %v375
        %v422 = vunpack.c.l.b16 %v376
        %v423 = vunpack.c.h.b16 %v376
        %v424 = vunpack.c.l.b16 %v377
        %v425 = vunpack.c.h.b16 %v377
        %v426 = vunpack.c.l.b16 %v378
        %v427 = vunpack.c.h.b16 %v378
        %v428 = vunpack.c.l.b16 %v379
        %v429 = vunpack.c.h.b16 %v379
        %v430 = vunpack.c.l.b16 %v380
        %v431 = vunpack.c.h.b16 %v380
        %v432 = vunpack.c.l.b16 %v381
        %v433 = vunpack.c.h.b16 %v381
        %v434 = vunpack.c.l.b16 %v382
        %v435 = vunpack.c.h.b16 %v382
        %v436 = vunpack.c.l.b16 %v383
        %v437 = vunpack.c.h.b16 %v383
        %v438 = vunpack.c.l.b16 %v384
        %v439 = vunpack.c.h.b16 %v384
        %v440 = vunpack.c.l.b16 %v385
        %v441 = vunpack.c.h.b16 %v385
        %v442 = vunpack.c.l.b16 %v386
        %v443 = vunpack.c.h.b16 %v386
        %v444 = vunpack.c.l.b16 %v387
        %v445 = vunpack.c.h.b16 %v387
        %v446 = vunpack.c.l.b16 %v388
        %v447 = vunpack.c.h.b16 %v388
        %v448 = vunpack.c.l.b16 %v389
        %v449 = vunpack.c.h.b16 %v389
        %v450 = vunpack.c.l.b16 %v390
        %v451 = vunpack.c.h.b16 %v390
        %v452 = vpack.c.b16 %v422, %v420
        %v453 = vpack.c.b16 %v423, %v421
        %v454 = vpack.c.b16 %v426, %v424
        %v455 = vpack.c.b16 %v427, %v425
        %v456 = vpack.c.b16 %v430, %v428
        %v457 = vpack.c.b16 %v431, %v429
        %v458 = vpack.c.b16 %v434, %v432
        %v459 = vpack.c.b16 %v435, %v433
        %v460 = vpack.c.b16 %v438, %v436
        %v461 = vpack.c.b16 %v439, %v437
        %v462 = vpack.c.b16 %v442, %v440
        %v463 = vpack.c.b16 %v443, %v441
        %v464 = vpack.c.b16 %v446, %v444
        %v465 = vpack.c.b16 %v447, %v445
        %v466 = vpack.c.b16 %v450, %v448
        %v467 = vpack.c.b16 %v451, %v449
        %484 = vmatprep.subr.bf16.mxu0 %v453
        %485 = vmatpush1.bf16.msra.mxu0 %v452
        %486 = vmatprep.subr.bf16.mxu0 %v455
        %487 = vmatpush1.bf16.msra.mxu0 %v454
        %488 = vmatprep.subr.bf16.mxu0 %v457
        %489 = vmatpush1.bf16.msra.mxu0 %v456
        %490 = vmatprep.subr.bf16.mxu0 %v459
        %491 = vmatpush1.bf16.msra.mxu0 %v458
        %492 = vmatprep.subr.bf16.mxu0 %v461
        %493 = vmatpush1.bf16.msra.mxu0 %v460
        %494 = vmatprep.subr.bf16.mxu0 %v463
        %495 = vmatpush1.bf16.msra.mxu0 %v462
        %496 = vmatprep.subr.bf16.mxu0 %v465
        %497 = vmatpush1.bf16.msra.mxu0 %v464
        %498 = vmatprep.subr.bf16.mxu0 %v467
        %499 = vmatpush1.bf16.msra.mxu0 %v466
        %500 = vmatprep.subr.bf16.mxu0 0
        %501 = vmatpush1.bf16.msra.mxu0 0
        %502 = vmatprep.subr.bf16.mxu0 0
        %503 = vmatpush1.bf16.msra.mxu0 0
        %504 = vmatprep.subr.bf16.mxu0 0
        %505 = vmatpush1.bf16.msra.mxu0 0
        %506 = vmatprep.subr.bf16.mxu0 0
        %507 = vmatpush1.bf16.msra.mxu0 0
        %508 = vmatprep.subr.bf16.mxu0 0
        %509 = vmatpush1.bf16.msra.mxu0 0
        %510 = vmatprep.subr.bf16.mxu0 0
        %511 = vmatpush1.bf16.msra.mxu0 0
        %512 = vmatprep.subr.bf16.mxu0 0
        %513 = vmatpush1.bf16.msra.mxu0 0
        %514 = vmatprep.subr.bf16.mxu0 0
        %515 = vmatpush1.bf16.msra.mxu0 0
        %516 = vmatprep.mubr.bf16.mxu0 0
        %517 = vmatmul.mubr.bf16.gmra.mrb[0].mxu0 %v373
        %v518 = vpop.f32.mrb[0].mxu0
        %v519 = vadd.f32 %v397, %v518
        %v520 = vpop.f32.mrb[0].mxu0
        %v521 = vadd.f32 %v401, %v520
        %v522 = vpop.f32.mrb[0].mxu0
        %v523 = vpop.f32.mrb[0].mxu0
        %524 = vdwg.mxu0
        %v525 = vmax.f32 %v519, 0.0
        %v526 = vmul.f32 %v521, 0.5
        %v527 = vtanh.pop %v526
        %v528 = vadd.f32 %v527, 1.0
        %v529 = vmul.f32 %v528, 0.5
        %v530 = vsub.f32 %v525, %v372
        %v531 = vmul.f32 %v529, %v530
        %v532 = vadd.f32 %v372, %v531
        %v533 = vpack.c.bf16 %v532, %v532
        %s534 = scalar_lea.vmem [#allocation5], 256
        %v535 = vld [vmem:[%s534] sm:$0xff]
        %v536 = vld [vmem:[%s534 + $0x8] sm:$0xff]
        %v537 = vld [vmem:[%s534 + $0x10] sm:$0xff]
        %v538 = vld [vmem:[%s534 + $0x18] sm:$0xff]
        %v539 = vld [vmem:[%s534 + $0x20] sm:$0xff]
        %v540 = vld [vmem:[%s534 + $0x28] sm:$0xff]
        %v541 = vld [vmem:[%s534 + $0x30] sm:$0xff]
        %v542 = vld [vmem:[%s534 + $0x38] sm:$0xff]
        %v543 = vld [vmem:[%s534 + $0x40] sm:$0xff]
        %v544 = vld [vmem:[%s534 + $0x48] sm:$0xff]
        %v545 = vld [vmem:[%s534 + $0x50] sm:$0xff]
        %v546 = vld [vmem:[%s534 + $0x58] sm:$0xff]
        %v547 = vld [vmem:[%s534 + $0x60] sm:$0xff]
        %v548 = vld [vmem:[%s534 + $0x68] sm:$0xff]
        %v549 = vld [vmem:[%s534 + $0x70] sm:$0xff]
        %v550 = vld [vmem:[%s534 + $0x78] sm:$0xff]
        %s551 = scalar_lea.vmem [#allocation7], 2
        %v552 = vld [vmem:[%s551] ss:$4 sm:$0x3]
        %v554 = vlaneseq
        %v555 = vshrl.u32 %v554, 7
        %v556 = vsub.s32 0, %v555
        %v557 = vrot.slane %v552, %v556
        %v558 = vlaneseq
        %v559 = vshrl.u32 %v558, 7
        %v560 = vsub.s32 1, %v559
        %v561 = vrot.slane %v552, %v560
        %v580 = vunpack.c.l.b16 %v535
        %v581 = vunpack.c.h.b16 %v535
        %v582 = vunpack.c.l.b16 %v536
        %v583 = vunpack.c.h.b16 %v536
        %v584 = vunpack.c.l.b16 %v537
        %v585 = vunpack.c.h.b16 %v537
        %v586 = vunpack.c.l.b16 %v538
        %v587 = vunpack.c.h.b16 %v538
        %v588 = vunpack.c.l.b16 %v539
        %v589 = vunpack.c.h.b16 %v539
        %v590 = vunpack.c.l.b16 %v540
        %v591 = vunpack.c.h.b16 %v540
        %v592 = vunpack.c.l.b16 %v541
        %v593 = vunpack.c.h.b16 %v541
        %v594 = vunpack.c.l.b16 %v542
        %v595 = vunpack.c.h.b16 %v542
        %v596 = vunpack.c.l.b16 %v543
        %v597 = vunpack.c.h.b16 %v543
        %v598 = vunpack.c.l.b16 %v544
        %v599 = vunpack.c.h.b16 %v544
        %v600 = vunpack.c.l.b16 %v545
        %v601 = vunpack.c.h.b16 %v545
        %v602 = vunpack.c.l.b16 %v546
        %v603 = vunpack.c.h.b16 %v546
        %v604 = vunpack.c.l.b16 %v547
        %v605 = vunpack.c.h.b16 %v547
        %v606 = vunpack.c.l.b16 %v548
        %v607 = vunpack.c.h.b16 %v548
        %v608 = vunpack.c.l.b16 %v549
        %v609 = vunpack.c.h.b16 %v549
        %v610 = vunpack.c.l.b16 %v550
        %v611 = vunpack.c.h.b16 %v550
        %v612 = vpack.c.b16 %v582, %v580
        %v613 = vpack.c.b16 %v583, %v581
        %v614 = vpack.c.b16 %v586, %v584
        %v615 = vpack.c.b16 %v587, %v585
        %v616 = vpack.c.b16 %v590, %v588
        %v617 = vpack.c.b16 %v591, %v589
        %v618 = vpack.c.b16 %v594, %v592
        %v619 = vpack.c.b16 %v595, %v593
        %v620 = vpack.c.b16 %v598, %v596
        %v621 = vpack.c.b16 %v599, %v597
        %v622 = vpack.c.b16 %v602, %v600
        %v623 = vpack.c.b16 %v603, %v601
        %v624 = vpack.c.b16 %v606, %v604
        %v625 = vpack.c.b16 %v607, %v605
        %v626 = vpack.c.b16 %v610, %v608
        %v627 = vpack.c.b16 %v611, %v609
        %644 = vmatprep.subr.bf16.mxu0 %v613
        %645 = vmatpush1.bf16.msra.mxu0 %v612
        %646 = vmatprep.subr.bf16.mxu0 %v615
        %647 = vmatpush1.bf16.msra.mxu0 %v614
        %648 = vmatprep.subr.bf16.mxu0 %v617
        %649 = vmatpush1.bf16.msra.mxu0 %v616
        %650 = vmatprep.subr.bf16.mxu0 %v619
        %651 = vmatpush1.bf16.msra.mxu0 %v618
        %652 = vmatprep.subr.bf16.mxu0 %v621
        %653 = vmatpush1.bf16.msra.mxu0 %v620
        %654 = vmatprep.subr.bf16.mxu0 %v623
        %655 = vmatpush1.bf16.msra.mxu0 %v622
        %656 = vmatprep.subr.bf16.mxu0 %v625
        %657 = vmatpush1.bf16.msra.mxu0 %v624
        %658 = vmatprep.subr.bf16.mxu0 %v627
        %659 = vmatpush1.bf16.msra.mxu0 %v626
        %660 = vmatprep.subr.bf16.mxu0 0
        %661 = vmatpush1.bf16.msra.mxu0 0
        %662 = vmatprep.subr.bf16.mxu0 0
        %663 = vmatpush1.bf16.msra.mxu0 0
        %664 = vmatprep.subr.bf16.mxu0 0
        %665 = vmatpush1.bf16.msra.mxu0 0
        %666 = vmatprep.subr.bf16.mxu0 0
        %667 = vmatpush1.bf16.msra.mxu0 0
        %668 = vmatprep.subr.bf16.mxu0 0
        %669 = vmatpush1.bf16.msra.mxu0 0
        %670 = vmatprep.subr.bf16.mxu0 0
        %671 = vmatpush1.bf16.msra.mxu0 0
        %672 = vmatprep.subr.bf16.mxu0 0
        %673 = vmatpush1.bf16.msra.mxu0 0
        %674 = vmatprep.subr.bf16.mxu0 0
        %675 = vmatpush1.bf16.msra.mxu0 0
        %676 = vmatprep.mubr.bf16.mxu0 0
        %677 = vmatmul.mubr.bf16.gmra.mrb[0].mxu0 %v533
        %v678 = vpop.f32.mrb[0].mxu0
        %v679 = vadd.f32 %v557, %v678
        %v680 = vpop.f32.mrb[0].mxu0
        %v681 = vadd.f32 %v561, %v680
        %v682 = vpop.f32.mrb[0].mxu0
        %v683 = vpop.f32.mrb[0].mxu0
        %684 = vdwg.mxu0
        %v685 = vmax.f32 %v679, 0.0
        %v686 = vmul.f32 %v681, 0.5
        %v687 = vtanh.pop %v686
        %v688 = vadd.f32 %v687, 1.0
        %v689 = vmul.f32 %v688, 0.5
        %v690 = vsub.f32 %v685, %v532
        %v691 = vmul.f32 %v689, %v690
        %v692 = vadd.f32 %v532, %v691
        %v693 = vpack.c.bf16 %v692, %v692
        %s694 = scalar_lea.vmem [#allocation5], 384
        %v695 = vld [vmem:[%s694] sm:$0xff]
        %v696 = vld [vmem:[%s694 + $0x8] sm:$0xff]
        %v697 = vld [vmem:[%s694 + $0x10] sm:$0xff]
        %v698 = vld [vmem:[%s694 + $0x18] sm:$0xff]
        %v699 = vld [vmem:[%s694 + $0x20] sm:$0xff]
        %v700 = vld [vmem:[%s694 + $0x28] sm:$0xff]
        %v701 = vld [vmem:[%s694 + $0x30] sm:$0xff]
        %v702 = vld [vmem:[%s694 + $0x38] sm:$0xff]
        %v703 = vld [vmem:[%s694 + $0x40] sm:$0xff]
        %v704 = vld [vmem:[%s694 + $0x48] sm:$0xff]
        %v705 = vld [vmem:[%s694 + $0x50] sm:$0xff]
        %v706 = vld [vmem:[%s694 + $0x58] sm:$0xff]
        %v707 = vld [vmem:[%s694 + $0x60] sm:$0xff]
        %v708 = vld [vmem:[%s694 + $0x68] sm:$0xff]
        %v709 = vld [vmem:[%s694 + $0x70] sm:$0xff]
        %v710 = vld [vmem:[%s694 + $0x78] sm:$0xff]
        %s711 = scalar_lea.vmem [#allocation7], 3
        %v712 = vld [vmem:[%s711] ss:$4 sm:$0x3]
        %v714 = vlaneseq
        %v715 = vshrl.u32 %v714, 7
        %v716 = vsub.s32 0, %v715
        %v717 = vrot.slane %v712, %v716
        %v718 = vlaneseq
        %v719 = vshrl.u32 %v718, 7
        %v720 = vsub.s32 1, %v719
        %v721 = vrot.slane %v712, %v720
        %v740 = vunpack.c.l.b16 %v695
        %v741 = vunpack.c.h.b16 %v695
        %v742 = vunpack.c.l.b16 %v696
        %v743 = vunpack.c.h.b16 %v696
        %v744 = vunpack.c.l.b16 %v697
        %v745 = vunpack.c.h.b16 %v697
        %v746 = vunpack.c.l.b16 %v698
        %v747 = vunpack.c.h.b16 %v698
        %v748 = vunpack.c.l.b16 %v699
        %v749 = vunpack.c.h.b16 %v699
        %v750 = vunpack.c.l.b16 %v700
        %v751 = vunpack.c.h.b16 %v700
        %v752 = vunpack.c.l.b16 %v701
        %v753 = vunpack.c.h.b16 %v701
        %v754 = vunpack.c.l.b16 %v702
        %v755 = vunpack.c.h.b16 %v702
        %v756 = vunpack.c.l.b16 %v703
        %v757 = vunpack.c.h.b16 %v703
        %v758 = vunpack.c.l.b16 %v704
        %v759 = vunpack.c.h.b16 %v704
        %v760 = vunpack.c.l.b16 %v705
        %v761 = vunpack.c.h.b16 %v705
        %v762 = vunpack.c.l.b16 %v706
        %v763 = vunpack.c.h.b16 %v706
        %v764 = vunpack.c.l.b16 %v707
        %v765 = vunpack.c.h.b16 %v707
        %v766 = vunpack.c.l.b16 %v708
        %v767 = vunpack.c.h.b16 %v708
        %v768 = vunpack.c.l.b16 %v709
        %v769 = vunpack.c.h.b16 %v709
        %v770 = vunpack.c.l.b16 %v710
        %v771 = vunpack.c.h.b16 %v710
        %v772 = vpack.c.b16 %v742, %v740
        %v773 = vpack.c.b16 %v743, %v741
        %v774 = vpack.c.b16 %v746, %v744
        %v775 = vpack.c.b16 %v747, %v745
        %v776 = vpack.c.b16 %v750, %v748
        %v777 = vpack.c.b16 %v751, %v749
        %v778 = vpack.c.b16 %v754, %v752
        %v779 = vpack.c.b16 %v755, %v753
        %v780 = vpack.c.b16 %v758, %v756
        %v781 = vpack.c.b16 %v759, %v757
        %v782 = vpack.c.b16 %v762, %v760
        %v783 = vpack.c.b16 %v763, %v761
        %v784 = vpack.c.b16 %v766, %v764
        %v785 = vpack.c.b16 %v767, %v765
        %v786 = vpack.c.b16 %v770, %v768
        %v787 = vpack.c.b16 %v771, %v769
        %804 = vmatprep.subr.bf16.mxu0 %v773
        %805 = vmatpush1.bf16.msra.mxu0 %v772
        %806 = vmatprep.subr.bf16.mxu0 %v775
        %807 = vmatpush1.bf16.msra.mxu0 %v774
        %808 = vmatprep.subr.bf16.mxu0 %v777
        %809 = vmatpush1.bf16.msra.mxu0 %v776
        %810 = vmatprep.subr.bf16.mxu0 %v779
        %811 = vmatpush1.bf16.msra.mxu0 %v778
        %812 = vmatprep.subr.bf16.mxu0 %v781
        %813 = vmatpush1.bf16.msra.mxu0 %v780
        %814 = vmatprep.subr.bf16.mxu0 %v783
        %815 = vmatpush1.bf16.msra.mxu0 %v782
        %816 = vmatprep.subr.bf16.mxu0 %v785
        %817 = vmatpush1.bf16.msra.mxu0 %v784
        %818 = vmatprep.subr.bf16.mxu0 %v787
        %819 = vmatpush1.bf16.msra.mxu0 %v786
        %820 = vmatprep.subr.bf16.mxu0 0
        %821 = vmatpush1.bf16.msra.mxu0 0
        %822 = vmatprep.subr.bf16.mxu0 0
        %823 = vmatpush1.bf16.msra.mxu0 0
        %824 = vmatprep.subr.bf16.mxu0 0
        %825 = vmatpush1.bf16.msra.mxu0 0
        %826 = vmatprep.subr.bf16.mxu0 0
        %827 = vmatpush1.bf16.msra.mxu0 0
        %828 = vmatprep.subr.bf16.mxu0 0
        %829 = vmatpush1.bf16.msra.mxu0 0
        %830 = vmatprep.subr.bf16.mxu0 0
        %831 = vmatpush1.bf16.msra.mxu0 0
        %832 = vmatprep.subr.bf16.mxu0 0
        %833 = vmatpush1.bf16.msra.mxu0 0
        %834 = vmatprep.subr.bf16.mxu0 0
        %835 = vmatpush1.bf16.msra.mxu0 0
        %836 = vmatprep.mubr.bf16.mxu0 0
        %837 = vmatmul.mubr.bf16.gmra.mrb[0].mxu0 %v693
        %v838 = vpop.f32.mrb[0].mxu0
        %v839 = vadd.f32 %v717, %v838
        %v840 = vpop.f32.mrb[0].mxu0
        %v841 = vadd.f32 %v721, %v840
        %v842 = vpop.f32.mrb[0].mxu0
        %v843 = vpop.f32.mrb[0].mxu0
        %844 = vdwg.mxu0
        %v845 = vmax.f32 %v839, 0.0
        %v846 = vmul.f32 %v841, 0.5
        %v847 = vtanh.pop %v846
        %v848 = vadd.f32 %v847, 1.0
        %v849 = vmul.f32 %v848, 0.5
        %v850 = vsub.f32 %v845, %v692
        %v851 = vmul.f32 %v849, %v850
        %v852 = vadd.f32 %v692, %v851
        %853 = vst [vmem:[%s212] sm:$0xff] %v852
        %s854 = sand.u32 %s97, 1
        %s855 = scalar_lea.sflag [#allocation4], %s854
        %s856 = sand.u32 %s97, 1
        %s857 = smul.addr %s856, 8
        %s858 = scalar_lea.vmem [#allocation8], %s857
        // Predicated region
        $region45: #{tpu_custom_call.1} parent=31 // pred_check
          %p859 = pneg %p107
        $region46: #{tpu_custom_call.1} parent=31 // pred_check_branch
          %861 = sbr.rel (%p859) target = $region48
        $region47: #{tpu_custom_call.1} parent=31 // pred_region
          %s863 = ssub.s32 128, 128
          %864 = vsyncadd %s855, %s863
          %s865 = smul.addr %s21, 128
          %s866 = scalar_lea.hbm %s3, %s865
          %s868 = sshll.u32 %s858, 4
          %s869 = int_to_ptr.vmem [resolvable:$true] %s868
          %871 = dma.vmem_to_hbm [thread:$0]  %s869, 128, %s866, %s855
        $region48: #{tpu_custom_call.1} parent=31 // pred_fallthru
          _
      $region32: #{tpu_custom_call.1} parent=5 // pred_fallthru
        _
      %p872 = scmp.le.s32.totalorder 2, %s16
      // Predicated region
      $region49: #{tpu_custom_call.1} parent=5 // pred_check
        %p873 = pneg %p872
      $region50: #{tpu_custom_call.1} parent=5 // pred_check_branch
        %875 = sbr.rel (%p873) target = $region52
      $region51: #{tpu_custom_call.1} parent=5 // pred_region
        %s876 = ssub.s32 %s16, 2
        // Predicated region
        $region53: #{tpu_custom_call.1} parent=51 // pred_check
          %p877 = pneg %p113
        $region54: #{tpu_custom_call.1} parent=51 // pred_check_branch
          %879 = sbr.rel (%p877) target = $region56
        $region55: #{tpu_custom_call.1} parent=51 // pred_region
          %s880 = sand.u32 %s98, 1
          %s881 = scalar_lea.sflag [#allocation4], %s880
          %s882 = sand.u32 %s98, 1
          %s883 = smul.addr %s882, 8
          %s884 = scalar_lea.vmem [#allocation8], %s883
          %885 = dma.done %s881, 128
        $region56: #{tpu_custom_call.1} parent=51 // pred_fallthru
          _
      $region52: #{tpu_custom_call.1} parent=5 // pred_fallthru
        _
    $region6: #{tpu_custom_call.1} parent=1 // loop_footer
      %s20 = sadd.s32 1, %s16
    $region7: #{tpu_custom_call.1} parent=1 // loop_footer_branch
      %15 = sbr.rel target = $region3
    $region8: #{tpu_custom_call.1} parent=1 // loop_exit
      _
    %886 = vsyncpa [#allocation3], 1
    %s887 = scalar_lea.sflag [#allocation3], 1
    %888 = vsyncpa %s887, 1
    %889 = vsyncpa [#allocation6], 1
    %890 = vsyncpa [#allocation4], 1
    %s891 = scalar_lea.sflag [#allocation4], 1
    %892 = vsyncpa %s891, 1

</llo_original>
